<compile_context>
chip_gen: v5e
topology: v5e:2x2
jax: 0.10.0
libtpu: 0.0.40
codegen_flags: <defaults>
</compile_context>

<pallas_src>
import functools

import jax
import jax.numpy as jnp
from jax.experimental import pallas as pl
from jax.experimental.pallas import tpu as pltpu


def _round_up(x, m):
    return (x + m - 1) // m * m


# ----------------------------------------------------------------------------
# Pallas tiled matmul (bf16 inputs on the MXU, f32 accumulation, bf16/f32 out)
# ----------------------------------------------------------------------------
def _matmul_kernel_noacc(a_ref, b_ref, o_ref):
    o_ref[...] = jnp.dot(a_ref[...], b_ref[...],
                         preferred_element_type=jnp.float32).astype(o_ref.dtype)


def _matmul_kernel_acc(a_ref, b_ref, o_ref, acc_ref):
    @pl.when(pl.program_id(2) == 0)
    def _():
        acc_ref[...] = jnp.zeros_like(acc_ref)

    acc_ref[...] += jnp.dot(a_ref[...], b_ref[...],
                            preferred_element_type=jnp.float32)

    @pl.when(pl.program_id(2) == pl.num_programs(2) - 1)
    def _():
        o_ref[...] = acc_ref[...].astype(o_ref.dtype)


def pallas_matmul(a, b_padded, n_out, out_dtype=jnp.bfloat16):
    """a: (M, K) activations; b_padded: (Kp, Np) bf16 pre-padded weight with
    Kp = round_up(K, 128), Np = round_up(n_out, 128).  Returns (M, n_out)."""
    M, K = a.shape
    Kp, Np = b_padded.shape
    assert Kp == _round_up(K, 128) and Np % 128 == 0 and Np >= n_out

    # K tiling: single fat K step when it fits; otherwise the largest
    # 128-multiple divisor of Kp (no zero-padding of the reduction dim).
    if Kp <= 640:
        tk = Kp
    else:
        tk = 128
        for cand in (512, 384, 256):
            if Kp % cand == 0:
                tk = cand
                break

    tm = min(512, _round_up(M, 16))          # multiple of 16: bf16 sublane pack
    tn = 256 if Np % 256 == 0 else 128
    Mp = _round_up(M, tm)

    a_p = jnp.pad(a.astype(jnp.bfloat16), ((0, Mp - M), (0, Kp - K)))
    nk = Kp // tk

    if nk == 1:
        out = pl.pallas_call(
            _matmul_kernel_noacc,
            out_shape=jax.ShapeDtypeStruct((Mp, Np), out_dtype),
            grid=(Mp // tm, Np // tn),
            in_specs=[pl.BlockSpec((tm, Kp), lambda i, j: (i, 0)),
                      pl.BlockSpec((Kp, tn), lambda i, j: (0, j))],
            out_specs=pl.BlockSpec((tm, tn), lambda i, j: (i, j)),
            compiler_params=pltpu.CompilerParams(
                dimension_semantics=("parallel", "parallel")),
        )(a_p, b_padded)
    else:
        out = pl.pallas_call(
            _matmul_kernel_acc,
            out_shape=jax.ShapeDtypeStruct((Mp, Np), out_dtype),
            grid=(Mp // tm, Np // tn, nk),
            in_specs=[pl.BlockSpec((tm, tk), lambda i, j, k: (i, k)),
                      pl.BlockSpec((tk, tn), lambda i, j, k: (k, j))],
            out_specs=pl.BlockSpec((tm, tn), lambda i, j, k: (i, j)),
            scratch_shapes=[pltpu.VMEM((tm, tn), jnp.float32)],
            compiler_params=pltpu.CompilerParams(
                dimension_semantics=("parallel", "parallel", "arbitrary")),
        )(a_p, b_padded)

    if Mp != M or Np != n_out:
        out = out[:M, :n_out]
    return out


# ----------------------------------------------------------------------------
# Convolutions = im2col (bf16 slicing glue) + Pallas matmul
# ----------------------------------------------------------------------------
def conv1x1(x, wm, cout, stride=1, out_dtype=jnp.bfloat16):
    # x: (N, H, W, Cin) NHWC;  wm: pre-packed (Kp, Np) bf16 weight matrix.
    if stride > 1:
        x = x[:, ::stride, ::stride, :]
    N, H, W, Cin = x.shape
    out = pallas_matmul(x.reshape(N * H * W, Cin), wm, cout, out_dtype=out_dtype)
    return out.reshape(N, H, W, cout)


def conv3x3(x, wm, cout, stride=1, padding=1, out_dtype=jnp.bfloat16):
    # im2col built in bf16 (half the HBM traffic of an f32 patch tensor).
    # TODO(synk): implicit im2col (grid axis over the 9 taps indexing the
    #             padded activation directly) would avoid materializing the
    #             9x patch tensor entirely.
    N, H, W, Cin = x.shape
    xb = x.astype(jnp.bfloat16)
    xp = jnp.pad(xb, ((0, 0), (padding, padding), (padding, padding), (0, 0)))
    Ho = (H + 2 * padding - 3) // stride + 1
    Wo = (W + 2 * padding - 3) // stride + 1
    patches = []
    for di in range(3):
        for dj in range(3):
            patches.append(xp[:, di:di + stride * (Ho - 1) + 1:stride,
                               dj:dj + stride * (Wo - 1) + 1:stride, :])
    p = jnp.stack(patches, axis=3).reshape(N * Ho * Wo, 9 * Cin)
    out = pallas_matmul(p, wm, cout, out_dtype=out_dtype)
    return out.reshape(N, Ho, Wo, cout)


# ----------------------------------------------------------------------------
# GroupNorm (groups=1) + optional residual + optional ReLU
#   - per-sample mean/var: tiny two-pass f32 reduction in XLA
#   - normalize/affine/residual/ReLU: row-chunked, fully parallel Pallas kernel
# ----------------------------------------------------------------------------
def _affine_kernel(x_ref, s_ref, b_ref, o_ref, *, relu):
    y = x_ref[...].astype(jnp.float32) * s_ref[...] + b_ref[...]
    if relu:
        y = jnp.maximum(y, 0.0)
    o_ref[...] = y.astype(o_ref.dtype)


def _affine_res_relu_kernel(x_ref, s_ref, b_ref, r_ref, o_ref):
    y = (x_ref[...].astype(jnp.float32) * s_ref[...] + b_ref[...]
         + r_ref[...].astype(jnp.float32))
    o_ref[...] = jnp.maximum(y, 0.0).astype(o_ref.dtype)


_GN_MAX_ROWS = 2048   # x block <= 2048*128*4 B = 1 MiB f32; v7x VMEM-safe


def _pick_gn_chunk(rows):
    if rows <= _GN_MAX_ROWS:
        return rows
    for d in range(_GN_MAX_ROWS, 7, -8):      # multiple of 8 that divides rows
        if rows % d == 0:
            return d
    return rows                               # fallback: one (full) block


def group_norm(x, gamma, beta, *, relu, residual=None, eps=1e-5,
               out_dtype=jnp.float32):
    """GroupNorm(num_groups=1) over (C,H,W) per sample, NHWC layout."""
    N, H, W, C = x.shape
    total = H * W * C
    if 128 % C == 0 and total % 128 == 0:
        # Lane-dense layout: last dim 128, gamma/beta tiled to 128 lanes once.
        lane = 128
        rows = total // 128
        rep = 128 // C
        g = jnp.tile(gamma.astype(jnp.float32), rep)
        b = jnp.tile(beta.astype(jnp.float32), rep)
    else:
        # Correct but slower (masked partial stores); not hit by ResNet widths.
        lane = C
        rows = H * W
        g = gamma.astype(jnp.float32)
        b = beta.astype(jnp.float32)

    xr = x.reshape(N, rows, lane)
    xf = xr.astype(jnp.float32)
    mean = jnp.mean(xf, axis=(1, 2), keepdims=True)                    # (N,1,1)
    var = jnp.mean(jnp.square(xf - mean), axis=(1, 2), keepdims=True)  # biased
    rstd = jax.lax.rsqrt(var + eps)
    scale = rstd * g.reshape(1, 1, lane)                            # (N,1,lane)
    bias = b.reshape(1, 1, lane) - mean * scale                     # (N,1,lane)

    chunk = _pick_gn_chunk(rows)
    nchunks = rows // chunk
    x_spec = pl.BlockSpec((1, chunk, lane), lambda n, c: (n, c, 0))
    p_spec = pl.BlockSpec((1, 1, lane), lambda n, c: (n, 0, 0))
    cp = pltpu.CompilerParams(dimension_semantics=("parallel", "parallel"))
    out_shape = jax.ShapeDtypeStruct((N, rows, lane), out_dtype)

    if residual is None:
        out = pl.pallas_call(
            functools.partial(_affine_kernel, relu=relu),
            out_shape=out_shape, grid=(N, nchunks),
            in_specs=[x_spec, p_spec, p_spec], out_specs=x_spec,
            compiler_params=cp,
        )(xr, scale, bias)
    else:
        rr = residual.reshape(N, rows, lane)
        out = pl.pallas_call(
            _affine_res_relu_kernel,
            out_shape=out_shape, grid=(N, nchunks),
            in_specs=[x_spec, p_spec, p_spec, x_spec], out_specs=x_spec,
            compiler_params=cp,
        )(xr, scale, bias, rr)
    return out.reshape(N, H, W, C)


# ----------------------------------------------------------------------------
# Parameters (He init; GN gamma=1, beta=0).  Weights pre-packed for the MXU.
# ----------------------------------------------------------------------------
EXPANSION = 4


def _pack_conv_weight(w):
    """OIHW f32 -> (Kp, Np) bf16 matmul matrix (rows: tap-major, cin-minor),
    pre-transposed / pre-cast / pre-padded once (no per-forward weight prep)."""
    cout, cin, kh, kw = w.shape
    k = kh * kw * cin
    wm = jnp.transpose(w, (2, 3, 1, 0)).reshape(k, cout)
    return jnp.pad(wm, ((0, _round_up(k, 128) - k),
                        (0, _round_up(cout, 128) - cout))).astype(jnp.bfloat16)


def init_bottleneck_params(key, inplanes, planes, stride=1, groups=1,
                           base_width=64):
    assert groups == 1  # TODO(synk): groups > 1 not implemented (module default)
    width = int(planes * (base_width / 64.0)) * groups
    outp = planes * EXPANSION
    ks = jax.random.split(key, 4)

    def conv_w(k, cout, cin, kh, kw):
        fan_in = cin * kh * kw
        return (jax.random.normal(k, (cout, cin, kh, kw), jnp.float32)
                * jnp.sqrt(2.0 / fan_in))

    params = {
        "stride": stride,
        "width": width,
        "outp": outp,
        "conv1_wm": _pack_conv_weight(conv_w(ks[0], width, inplanes, 1, 1)),
        "gn1_g": jnp.ones((width,), jnp.float32),
        "gn1_b": jnp.zeros((width,), jnp.float32),
        "conv2_wm": _pack_conv_weight(conv_w(ks[1], width, width, 3, 3)),
        "gn2_g": jnp.ones((width,), jnp.float32),
        "gn2_b": jnp.zeros((width,), jnp.float32),
        "conv3_wm": _pack_conv_weight(conv_w(ks[2], outp, width, 1, 1)),
        "gn3_g": jnp.ones((outp,), jnp.float32),
        "gn3_b": jnp.zeros((outp,), jnp.float32),
    }
    if stride != 1 or inplanes != outp:
        # downsample = 1x1 conv (stride) + GroupNorm, mirroring torchvision.
        params["ds_wm"] = _pack_conv_weight(conv_w(ks[3], outp, inplanes, 1, 1))
        params["ds_g"] = jnp.ones((outp,), jnp.float32)
        params["ds_b"] = jnp.zeros((outp,), jnp.float32)
    return params


# ----------------------------------------------------------------------------
# Bottleneck forward (matches the PyTorch module's forward)
# ----------------------------------------------------------------------------
def bottleneck_forward(params, x_nchw):
    # TODO(synk): NCHW<->NHWC transposes at the block boundary are XLA copies;
    #             folding them into the conv index maps is left undone.
    x = jnp.transpose(x_nchw, (0, 2, 3, 1)).astype(jnp.float32)   # NCHW -> NHWC
    stride = params["stride"]
    width, outp = params["width"], params["outp"]

    out = conv1x1(x, params["conv1_wm"], width)                        # bf16
    out = group_norm(out, params["gn1_g"], params["gn1_b"], relu=True,
                     out_dtype=jnp.bfloat16)

    out = conv3x3(out, params["conv2_wm"], width, stride=stride)       # bf16
    out = group_norm(out, params["gn2_g"], params["gn2_b"], relu=True,
                     out_dtype=jnp.bfloat16)

    out = conv1x1(out, params["conv3_wm"], outp)                       # bf16

    if "ds_wm" in params:
        residual = conv1x1(x, params["ds_wm"], outp, stride=stride)    # bf16
        residual = group_norm(residual, params["ds_g"], params["ds_b"],
                              relu=False, out_dtype=jnp.bfloat16)
    else:
        residual = x                                                   # f32

    # GN3 -> +residual -> ReLU fused in one Pallas kernel (f32 module output).
    out = group_norm(out, params["gn3_g"], params["gn3_b"], relu=True,
                     residual=residual, out_dtype=jnp.float32)
    return jnp.transpose(out, (0, 3, 1, 2))                       # NHWC -> NCHW


if __name__ == "__main__":
    key = jax.random.PRNGKey(0)
    k1, k2, k3, k4 = jax.random.split(key, 4)

    # Case 1: identity residual (inplanes == planes * expansion, stride 1).
    params1 = init_bottleneck_params(k1, inplanes=64, planes=16, stride=1)
    x1 = jax.random.normal(k2, (2, 64, 16, 16), jnp.float32)      # NCHW
    fwd1 = jax.jit(lambda x: bottleneck_forward(params1, x))
    y1 = fwd1(x1)
    jax.block_until_ready(y1)
    assert y1.shape == (2, 64, 16, 16)
    assert bool(jnp.all(jnp.isfinite(y1)))
    assert bool(jnp.all(y1 >= 0.0))   # final ReLU

    # Case 2: strided block with 1x1-conv + GN downsample on the residual.
    params2 = init_bottleneck_params(k3, inplanes=32, planes=16, stride=2)
    x2 = jax.random.normal(k4, (2, 32, 16, 16), jnp.float32)      # NCHW
    fwd2 = jax.jit(lambda x: bottleneck_forward(params2, x))
    y2 = fwd2(x2)
    jax.block_until_ready(y2)
    assert y2.shape == (2, 64, 8, 8)
    assert bool(jnp.all(jnp.isfinite(y2)))
    assert bool(jnp.all(y2 >= 0.0))

    print("KERNEL_OK")
</pallas_src>

<mosaic_0001>
module attributes {stable_mosaic.version = 11 : i64} {
  func.func @_matmul_kernel_noacc(%arg0: i32, %arg1: i32, %arg2: memref<512x128xbf16, #tpu.memory_space<vmem>>, %arg3: memref<128x128xbf16, #tpu.memory_space<vmem>>, %arg4: memref<512x128xbf16, #tpu.memory_space<vmem>>) attributes {dimension_semantics = [#tpu.dimension_semantics<parallel>, #tpu.dimension_semantics<parallel>], iteration_bounds = array<i64: 1, 1>, scalar_prefetch = 0 : i64, scratch_operands = 0 : i64, tpu.core_type = #tpu.core_type<tc>, window_params = [{transform_indices = @transform_0, window_bounds = array<i64: 512, 128>}, {transform_indices = @transform_1, window_bounds = array<i64: 128, 128>}, {transform_indices = @transform_2, window_bounds = array<i64: 512, 128>}]} {
    %c0 = arith.constant 0 : index
    %c0_0 = arith.constant 0 : index
    %0 = vector.load %arg2[%c0, %c0_0] : memref<512x128xbf16, #tpu.memory_space<vmem>>, vector<512x128xbf16>
    %c0_1 = arith.constant 0 : index
    %c0_2 = arith.constant 0 : index
    %1 = vector.load %arg3[%c0_1, %c0_2] : memref<128x128xbf16, #tpu.memory_space<vmem>>, vector<128x128xbf16>
    %cst = arith.constant dense<0.000000e+00> : vector<512x128xf32>
    %2 = tpu.matmul %0, %1, %cst {dimension_numbers = #tpu.dot_dimension_numbers<[1], [0], [0], [1], [0, 0, 1, 1], [], []>} : vector<512x128xbf16>, vector<128x128xbf16>, vector<512x128xf32> -> vector<512x128xf32>
    %3 = arith.truncf %2 : vector<512x128xf32> to vector<512x128xbf16>
    %c0_3 = arith.constant 0 : index
    %c0_4 = arith.constant 0 : index
    %4 = vector.load %arg4[%c0_3, %c0_4] : memref<512x128xbf16, #tpu.memory_space<vmem>>, vector<512x128xbf16>
    tpu.vector_store %arg4[%c0_3, %c0_4], %3 {strides = array<i32>} : memref<512x128xbf16, #tpu.memory_space<vmem>>, vector<512x128xbf16>,
    return
  }
  func.func @transform_0(%arg0: i32, %arg1: i32) -> (i32, i32) {
    %c0_i32 = arith.constant 0 : i32
    %c0_i32_0 = arith.constant 0 : i32
    return %arg0, %c0_i32 : i32, i32
  }
  func.func @transform_1(%arg0: i32, %arg1: i32) -> (i32, i32) {
    %c0_i32 = arith.constant 0 : i32
    %c0_i32_0 = arith.constant 0 : i32
    return %c0_i32, %arg1 : i32, i32
  }
  func.func @transform_2(%arg0: i32, %arg1: i32) -> (i32, i32) {
    %c0_i32 = arith.constant 0 : i32
    return %arg0, %arg1 : i32, i32
  }
}

module attributes {stable_mosaic.version = 11 : i64} {
  func.func @_affine_kernel(%arg0: i32, %arg1: i32, %arg2: memref<1x32x128xbf16, #tpu.memory_space<vmem>>, %arg3: memref<1x1x128xf32, #tpu.memory_space<vmem>>, %arg4: memref<1x1x128xf32, #tpu.memory_space<vmem>>, %arg5: memref<1x32x128xbf16, #tpu.memory_space<vmem>>) attributes {dimension_semantics = [#tpu.dimension_semantics<parallel>, #tpu.dimension_semantics<parallel>], iteration_bounds = array<i64: 2, 1>, scalar_prefetch = 0 : i64, scratch_operands = 0 : i64, tpu.core_type = #tpu.core_type<tc>, window_params = [{transform_indices = @transform_0, window_bounds = array<i64: 1, 32, 128>}, {transform_indices = @transform_1, window_bounds = array<i64: 1, 1, 128>}, {transform_indices = @transform_2, window_bounds = array<i64: 1, 1, 128>}, {transform_indices = @transform_3, window_bounds = array<i64: 1, 32, 128>}]} {
    %c0 = arith.constant 0 : index
    %c0_0 = arith.constant 0 : index
    %c0_1 = arith.constant 0 : index
    %0 = vector.load %arg2[%c0, %c0_0, %c0_1] : memref<1x32x128xbf16, #tpu.memory_space<vmem>>, vector<1x32x128xbf16>
    %1 = arith.extf %0 : vector<1x32x128xbf16> to vector<1x32x128xf32>
    %c0_2 = arith.constant 0 : index
    %c0_3 = arith.constant 0 : index
    %c0_4 = arith.constant 0 : index
    %2 = vector.load %arg3[%c0_2, %c0_3, %c0_4] : memref<1x1x128xf32, #tpu.memory_space<vmem>>, vector<1x1x128xf32>
    %3 = vector.broadcast %2 : vector<1x1x128xf32> to vector<1x32x128xf32>
    %4 = arith.mulf %1, %3 : vector<1x32x128xf32>
    %c0_5 = arith.constant 0 : index
    %c0_6 = arith.constant 0 : index
    %c0_7 = arith.constant 0 : index
    %5 = vector.load %arg4[%c0_5, %c0_6, %c0_7] : memref<1x1x128xf32, #tpu.memory_space<vmem>>, vector<1x1x128xf32>
    %6 = vector.broadcast %5 : vector<1x1x128xf32> to vector<1x32x128xf32>
    %7 = arith.addf %4, %6 : vector<1x32x128xf32>
    %cst = arith.constant 0.000000e+00 : f32
    %8 = vector.broadcast %cst : f32 to vector<1x32x128xf32>
    %9 = arith.maximumf %7, %8 : vector<1x32x128xf32>
    %10 = arith.truncf %9 : vector<1x32x128xf32> to vector<1x32x128xbf16>
    %c0_8 = arith.constant 0 : index
    %c0_9 = arith.constant 0 : index
    %c0_10 = arith.constant 0 : index
    %11 = vector.load %arg5[%c0_8, %c0_9, %c0_10] : memref<1x32x128xbf16, #tpu.memory_space<vmem>>, vector<1x32x128xbf16>
    tpu.vector_store %arg5[%c0_8, %c0_9, %c0_10], %10 {strides = array<i32>} : memref<1x32x128xbf16, #tpu.memory_space<vmem>>, vector<1x32x128xbf16>,
    return
  }
  func.func @transform_0(%arg0: i32, %arg1: i32) -> (i32, i32, i32) {
    %c0_i32 = arith.constant 0 : i32
    %c0_i32_0 = arith.constant 0 : i32
    return %arg0, %arg1, %c0_i32 : i32, i32, i32
  }
  func.func @transform_1(%arg0: i32, %arg1: i32) -> (i32, i32, i32) {
    %c0_i32 = arith.constant 0 : i32
    %c0_i32_0 = arith.constant 0 : i32
    %c0_i32_1 = arith.constant 0 : i32
    return %arg0, %c0_i32, %c0_i32_0 : i32, i32, i32
  }
  func.func @transform_2(%arg0: i32, %arg1: i32) -> (i32, i32, i32) {
    %c0_i32 = arith.constant 0 : i32
    %c0_i32_0 = arith.constant 0 : i32
    %c0_i32_1 = arith.constant 0 : i32
    return %arg0, %c0_i32, %c0_i32_0 : i32, i32, i32
  }
  func.func @transform_3(%arg0: i32, %arg1: i32) -> (i32, i32, i32) {
    %c0_i32 = arith.constant 0 : i32
    %c0_i32_0 = arith.constant 0 : i32
    return %arg0, %arg1, %c0_i32 : i32, i32, i32
  }
}

module attributes {stable_mosaic.version = 11 : i64} {
  func.func @_matmul_kernel_noacc(%arg0: i32, %arg1: i32, %arg2: memref<512x256xbf16, #tpu.memory_space<vmem>>, %arg3: memref<256x128xbf16, #tpu.memory_space<vmem>>, %arg4: memref<512x128xbf16, #tpu.memory_space<vmem>>) attributes {dimension_semantics = [#tpu.dimension_semantics<parallel>, #tpu.dimension_semantics<parallel>], iteration_bounds = array<i64: 1, 1>, scalar_prefetch = 0 : i64, scratch_operands = 0 : i64, tpu.core_type = #tpu.core_type<tc>, window_params = [{transform_indices = @transform_0, window_bounds = array<i64: 512, 256>}, {transform_indices = @transform_1, window_bounds = array<i64: 256, 128>}, {transform_indices = @transform_2, window_bounds = array<i64: 512, 128>}]} {
    %c0 = arith.constant 0 : index
    %c0_0 = arith.constant 0 : index
    %0 = vector.load %arg2[%c0, %c0_0] : memref<512x256xbf16, #tpu.memory_space<vmem>>, vector<512x256xbf16>
    %c0_1 = arith.constant 0 : index
    %c0_2 = arith.constant 0 : index
    %1 = vector.load %arg3[%c0_1, %c0_2] : memref<256x128xbf16, #tpu.memory_space<vmem>>, vector<256x128xbf16>
    %cst = arith.constant dense<0.000000e+00> : vector<512x128xf32>
    %2 = tpu.matmul %0, %1, %cst {dimension_numbers = #tpu.dot_dimension_numbers<[1], [0], [0], [1], [0, 0, 1, 1], [], []>} : vector<512x256xbf16>, vector<256x128xbf16>, vector<512x128xf32> -> vector<512x128xf32>
    %3 = arith.truncf %2 : vector<512x128xf32> to vector<512x128xbf16>
    %c0_3 = arith.constant 0 : index
    %c0_4 = arith.constant 0 : index
    %4 = vector.load %arg4[%c0_3, %c0_4] : memref<512x128xbf16, #tpu.memory_space<vmem>>, vector<512x128xbf16>
    tpu.vector_store %arg4[%c0_3, %c0_4], %3 {strides = array<i32>} : memref<512x128xbf16, #tpu.memory_space<vmem>>, vector<512x128xbf16>,
    return
  }
  func.func @transform_0(%arg0: i32, %arg1: i32) -> (i32, i32) {
    %c0_i32 = arith.constant 0 : i32
    %c0_i32_0 = arith.constant 0 : i32
    return %arg0, %c0_i32 : i32, i32
  }
  func.func @transform_1(%arg0: i32, %arg1: i32) -> (i32, i32) {
    %c0_i32 = arith.constant 0 : i32
    %c0_i32_0 = arith.constant 0 : i32
    return %c0_i32, %arg1 : i32, i32
  }
  func.func @transform_2(%arg0: i32, %arg1: i32) -> (i32, i32) {
    %c0_i32 = arith.constant 0 : i32
    return %arg0, %arg1 : i32, i32
  }
}

module attributes {stable_mosaic.version = 11 : i64} {
  func.func @_matmul_kernel_noacc(%arg0: i32, %arg1: i32, %arg2: memref<512x128xbf16, #tpu.memory_space<vmem>>, %arg3: memref<128x128xbf16, #tpu.memory_space<vmem>>, %arg4: memref<512x128xbf16, #tpu.memory_space<vmem>>) attributes {dimension_semantics = [#tpu.dimension_semantics<parallel>, #tpu.dimension_semantics<parallel>], iteration_bounds = array<i64: 1, 1>, scalar_prefetch = 0 : i64, scratch_operands = 0 : i64, tpu.core_type = #tpu.core_type<tc>, window_params = [{transform_indices = @transform_0, window_bounds = array<i64: 512, 128>}, {transform_indices = @transform_1, window_bounds = array<i64: 128, 128>}, {transform_indices = @transform_2, window_bounds = array<i64: 512, 128>}]} {
    %c0 = arith.constant 0 : index
    %c0_0 = arith.constant 0 : index
    %0 = vector.load %arg2[%c0, %c0_0] : memref<512x128xbf16, #tpu.memory_space<vmem>>, vector<512x128xbf16>
    %c0_1 = arith.constant 0 : index
    %c0_2 = arith.constant 0 : index
    %1 = vector.load %arg3[%c0_1, %c0_2] : memref<128x128xbf16, #tpu.memory_space<vmem>>, vector<128x128xbf16>
    %cst = arith.constant dense<0.000000e+00> : vector<512x128xf32>
    %2 = tpu.matmul %0, %1, %cst {dimension_numbers = #tpu.dot_dimension_numbers<[1], [0], [0], [1], [0, 0, 1, 1], [], []>} : vector<512x128xbf16>, vector<128x128xbf16>, vector<512x128xf32> -> vector<512x128xf32>
    %3 = arith.truncf %2 : vector<512x128xf32> to vector<512x128xbf16>
    %c0_3 = arith.constant 0 : index
    %c0_4 = arith.constant 0 : index
    %4 = vector.load %arg4[%c0_3, %c0_4] : memref<512x128xbf16, #tpu.memory_space<vmem>>, vector<512x128xbf16>
    tpu.vector_store %arg4[%c0_3, %c0_4], %3 {strides = array<i32>} : memref<512x128xbf16, #tpu.memory_space<vmem>>, vector<512x128xbf16>,
    return
  }
  func.func @transform_0(%arg0: i32, %arg1: i32) -> (i32, i32) {
    %c0_i32 = arith.constant 0 : i32
    %c0_i32_0 = arith.constant 0 : i32
    return %arg0, %c0_i32 : i32, i32
  }
  func.func @transform_1(%arg0: i32, %arg1: i32) -> (i32, i32) {
    %c0_i32 = arith.constant 0 : i32
    %c0_i32_0 = arith.constant 0 : i32
    return %c0_i32, %arg1 : i32, i32
  }
  func.func @transform_2(%arg0: i32, %arg1: i32) -> (i32, i32) {
    %c0_i32 = arith.constant 0 : i32
    return %arg0, %arg1 : i32, i32
  }
}

module attributes {stable_mosaic.version = 11 : i64} {
  func.func @_affine_res_relu_kernel(%arg0: i32, %arg1: i32, %arg2: memref<1x128x128xbf16, #tpu.memory_space<vmem>>, %arg3: memref<1x1x128xf32, #tpu.memory_space<vmem>>, %arg4: memref<1x1x128xf32, #tpu.memory_space<vmem>>, %arg5: memref<1x128x128xf32, #tpu.memory_space<vmem>>, %arg6: memref<1x128x128xf32, #tpu.memory_space<vmem>>) attributes {dimension_semantics = [#tpu.dimension_semantics<parallel>, #tpu.dimension_semantics<parallel>], iteration_bounds = array<i64: 2, 1>, scalar_prefetch = 0 : i64, scratch_operands = 0 : i64, tpu.core_type = #tpu.core_type<tc>, window_params = [{transform_indices = @transform_0, window_bounds = array<i64: 1, 128, 128>}, {transform_indices = @transform_1, window_bounds = array<i64: 1, 1, 128>}, {transform_indices = @transform_2, window_bounds = array<i64: 1, 1, 128>}, {transform_indices = @transform_3, window_bounds = array<i64: 1, 128, 128>}, {transform_indices = @transform_4, window_bounds = array<i64: 1, 128, 128>}]} {
    %c0 = arith.constant 0 : index
    %c0_0 = arith.constant 0 : index
    %c0_1 = arith.constant 0 : index
    %0 = vector.load %arg2[%c0, %c0_0, %c0_1] : memref<1x128x128xbf16, #tpu.memory_space<vmem>>, vector<1x128x128xbf16>
    %1 = arith.extf %0 : vector<1x128x128xbf16> to vector<1x128x128xf32>
    %c0_2 = arith.constant 0 : index
    %c0_3 = arith.constant 0 : index
    %c0_4 = arith.constant 0 : index
    %2 = vector.load %arg3[%c0_2, %c0_3, %c0_4] : memref<1x1x128xf32, #tpu.memory_space<vmem>>, vector<1x1x128xf32>
    %3 = vector.broadcast %2 : vector<1x1x128xf32> to vector<1x128x128xf32>
    %4 = arith.mulf %1, %3 : vector<1x128x128xf32>
    %c0_5 = arith.constant 0 : index
    %c0_6 = arith.constant 0 : index
    %c0_7 = arith.constant 0 : index
    %5 = vector.load %arg4[%c0_5, %c0_6, %c0_7] : memref<1x1x128xf32, #tpu.memory_space<vmem>>, vector<1x1x128xf32>
    %6 = vector.broadcast %5 : vector<1x1x128xf32> to vector<1x128x128xf32>
    %7 = arith.addf %4, %6 : vector<1x128x128xf32>
    %c0_8 = arith.constant 0 : index
    %c0_9 = arith.constant 0 : index
    %c0_10 = arith.constant 0 : index
    %8 = vector.load %arg5[%c0_8, %c0_9, %c0_10] : memref<1x128x128xf32, #tpu.memory_space<vmem>>, vector<1x128x128xf32>
    %9 = arith.addf %7, %8 : vector<1x128x128xf32>
    %cst = arith.constant 0.000000e+00 : f32
    %10 = vector.broadcast %cst : f32 to vector<1x128x128xf32>
    %11 = arith.maximumf %9, %10 : vector<1x128x128xf32>
    %c0_11 = arith.constant 0 : index
    %c0_12 = arith.constant 0 : index
    %c0_13 = arith.constant 0 : index
    %12 = vector.load %arg6[%c0_11, %c0_12, %c0_13] : memref<1x128x128xf32, #tpu.memory_space<vmem>>, vector<1x128x128xf32>
    tpu.vector_store %arg6[%c0_11, %c0_12, %c0_13], %11 {strides = array<i32>} : memref<1x128x128xf32, #tpu.memory_space<vmem>>, vector<1x128x128xf32>,
    return
  }
  func.func @transform_0(%arg0: i32, %arg1: i32) -> (i32, i32, i32) {
    %c0_i32 = arith.constant 0 : i32
    %c0_i32_0 = arith.constant 0 : i32
    return %arg0, %arg1, %c0_i32 : i32, i32, i32
  }
  func.func @transform_1(%arg0: i32, %arg1: i32) -> (i32, i32, i32) {
    %c0_i32 = arith.constant 0 : i32
    %c0_i32_0 = arith.constant 0 : i32
    %c0_i32_1 = arith.constant 0 : i32
    return %arg0, %c0_i32, %c0_i32_0 : i32, i32, i32
  }
  func.func @transform_2(%arg0: i32, %arg1: i32) -> (i32, i32, i32) {
    %c0_i32 = arith.constant 0 : i32
    %c0_i32_0 = arith.constant 0 : i32
    %c0_i32_1 = arith.constant 0 : i32
    return %arg0, %c0_i32, %c0_i32_0 : i32, i32, i32
  }
  func.func @transform_3(%arg0: i32, %arg1: i32) -> (i32, i32, i32) {
    %c0_i32 = arith.constant 0 : i32
    %c0_i32_0 = arith.constant 0 : i32
    return %arg0, %arg1, %c0_i32 : i32, i32, i32
  }
  func.func @transform_4(%arg0: i32, %arg1: i32) -> (i32, i32, i32) {
    %c0_i32 = arith.constant 0 : i32
    %c0_i32_0 = arith.constant 0 : i32
    return %arg0, %arg1, %c0_i32 : i32, i32, i32
  }
}

</mosaic_0001>

<llo_original>
// kernel: _lambda_.7
$region0: #{_lambda_.7}
  #allocation0 [shape = 'u32[]', space=smem, size = 0x4, offset = 0x4, fixed_abs, tag = 'smem constant byte address 0x4 - core index']
  #allocation1 [shape = 'u32[72,128]{1,0:T(1,128)}', space=vmem, size = 0x9000, scoped, tag = 'internal scratch']
  %s0 = inlined_call_operand.vmem [shape: bf16[2,32,128], index: 0, kind: input, shape index: {}]
  %s1 = inlined_call_operand.vmem [shape: f32[2,1,128], index: 1, kind: input, shape index: {}]
  %s2 = inlined_call_operand.vmem [shape: f32[2,1,128], index: 2, kind: input, shape index: {}]
  %s3 = inlined_call_operand.vmem [shape: bf16[2,32,128], index: 3, kind: output, shape index: {}]
  %s4 = sld [smem:[#allocation0]]
  $region45: #{_lambda_.7} parent=0
    _
  %s6 = ssub.s32 1, %s4
  %s7 = scalar_select 0, %s6, %s4
  loop: start=0, step=1, limit=4
  $region2: #{_lambda_.7} parent=0 // loop_pre_header
    _
  $region3: #{_lambda_.7} parent=0 // loop_header
    %s9 = sphi 0, %s13
    %p10 = scmp.ge.s32.totalorder %s9, 4
    %s16 = sphi 0, %s28
    %s17 = sphi 0, %s24
    %s18 = sphi 0, %s16
    %s19 = sphi 0, %s17
    %s20 = sphi 0, %s18
    %s21 = sphi 0, %s19
    %s33 = sphi 0, %s35
    %s36 = sphi 0, %s33
    %s37 = sphi 0, %s36
    %s53 = sphi 0, %s37
    %s59 = sphi 0, %s61
    %s62 = sphi 0, %s59
    %s63 = sphi 0, %s62
    %s79 = sphi 0, %s63
    %s85 = sphi 0, %s87
    %s88 = sphi 0, %s85
    %s89 = sphi 0, %s88
    %s105 = sphi 0, %s89
    %s113 = sphi 0, %s115
    %s116 = sphi 0, %s113
    %s117 = sphi 0, %s116
    %s133 = sphi 0, %s117
  $region4: #{_lambda_.7} parent=0 // loop_header_branch
    %12 = sbr.rel (%p10) target = $region8
  $region5: #{_lambda_.7} parent=0 // loop_body
    %s14 = ssub.s32 %s9, 1
    %s15 = ssub.s32 %s9, 2
    %s22 = sadd.s32 1, %s17
    %p23 = scmp.ge.s32.totalorder %s22, 1
    %s24 = scalar_select %p23, 0, %s22
    %s25 = sadd.s32 1, %s16
    %s26 = scalar_select %p23, %s25, %s16
    %p27 = scmp.ge.s32.totalorder %s26, 2
    %s28 = scalar_select %p27, 0, %s26
    %s29 = ssub.s32 %s16, %s28
    %s30 = ssub.s32 %s17, %s24
    %s31 = sor.u32 %s29, %s30
    %p32 = scmp.eq.s32.totalorder %s31, 0
    %s34 = sadd.s32 %s33, 1
    %s35 = scalar_select %p32, %s33, %s34
    %p38 = pneg %p32
    %p39 = scmp.eq.s32.totalorder %s9, 1
    %p40 = por %p38, %p39
    %p41 = scmp.ne.s32.totalorder %s33, %s36
    %p42 = scmp.eq.s32.totalorder %s9, 0
    %p43 = por %p41, %p42
    %p44 = scmp.ne.s32.totalorder %s33, %s36
    %p45 = scmp.eq.s32.totalorder %s14, 1
    %p46 = por %p44, %p45
    %p47 = scmp.ne.s32.totalorder %s36, %s37
    %p48 = scmp.eq.s32.totalorder %s14, 0
    %p49 = por %p47, %p48
    %p50 = scmp.ne.s32.totalorder %s36, %s37
    %p51 = scmp.eq.s32.totalorder %s15, 1
    %p52 = por %p50, %p51
    %p54 = scmp.ne.s32.totalorder %s37, %s53
    %p55 = scmp.eq.s32.totalorder %s15, 0
    %p56 = por %p54, %p55
    %s57 = ssub.s32 %s16, %s28
    %p58 = scmp.eq.s32.totalorder %s57, 0
    %s60 = sadd.s32 %s59, 1
    %s61 = scalar_select %p58, %s59, %s60
    %p64 = pneg %p58
    %p65 = scmp.eq.s32.totalorder %s9, 1
    %p66 = por %p64, %p65
    %p67 = scmp.ne.s32.totalorder %s59, %s62
    %p68 = scmp.eq.s32.totalorder %s9, 0
    %p69 = por %p67, %p68
    %p70 = scmp.ne.s32.totalorder %s59, %s62
    %p71 = scmp.eq.s32.totalorder %s14, 1
    %p72 = por %p70, %p71
    %p73 = scmp.ne.s32.totalorder %s62, %s63
    %p74 = scmp.eq.s32.totalorder %s14, 0
    %p75 = por %p73, %p74
    %p76 = scmp.ne.s32.totalorder %s62, %s63
    %p77 = scmp.eq.s32.totalorder %s15, 1
    %p78 = por %p76, %p77
    %p80 = scmp.ne.s32.totalorder %s63, %s79
    %p81 = scmp.eq.s32.totalorder %s15, 0
    %p82 = por %p80, %p81
    %s83 = ssub.s32 %s16, %s28
    %p84 = scmp.eq.s32.totalorder %s83, 0
    %s86 = sadd.s32 %s85, 1
    %s87 = scalar_select %p84, %s85, %s86
    %p90 = pneg %p84
    %p91 = scmp.eq.s32.totalorder %s9, 1
    %p92 = por %p90, %p91
    %p93 = scmp.ne.s32.totalorder %s85, %s88
    %p94 = scmp.eq.s32.totalorder %s9, 0
    %p95 = por %p93, %p94
    %p96 = scmp.ne.s32.totalorder %s85, %s88
    %p97 = scmp.eq.s32.totalorder %s14, 1
    %p98 = por %p96, %p97
    %p99 = scmp.ne.s32.totalorder %s88, %s89
    %p100 = scmp.eq.s32.totalorder %s14, 0
    %p101 = por %p99, %p100
    %p102 = scmp.ne.s32.totalorder %s88, %s89
    %p103 = scmp.eq.s32.totalorder %s15, 1
    %p104 = por %p102, %p103
    %p106 = scmp.ne.s32.totalorder %s89, %s105
    %p107 = scmp.eq.s32.totalorder %s15, 0
    %p108 = por %p106, %p107
    %s109 = ssub.s32 %s16, %s28
    %s110 = ssub.s32 %s17, %s24
    %s111 = sor.u32 %s109, %s110
    %p112 = scmp.eq.s32.totalorder %s111, 0
    %s114 = sadd.s32 %s113, 1
    %s115 = scalar_select %p112, %s113, %s114
    %p118 = pneg %p112
    %p119 = scmp.eq.s32.totalorder %s9, 1
    %p120 = por %p118, %p119
    %p121 = scmp.ne.s32.totalorder %s113, %s116
    %p122 = scmp.eq.s32.totalorder %s9, 0
    %p123 = por %p121, %p122
    %p124 = scmp.ne.s32.totalorder %s113, %s116
    %p125 = scmp.eq.s32.totalorder %s14, 1
    %p126 = por %p124, %p125
    %p127 = scmp.ne.s32.totalorder %s116, %s117
    %p128 = scmp.eq.s32.totalorder %s14, 0
    %p129 = por %p127, %p128
    %p130 = scmp.ne.s32.totalorder %s116, %s117
    %p131 = scmp.eq.s32.totalorder %s15, 1
    %p132 = por %p130, %p131
    %p134 = scmp.ne.s32.totalorder %s117, %s133
    %p135 = scmp.eq.s32.totalorder %s15, 0
    %p136 = por %p134, %p135
    %p137 = scmp.le.s32.totalorder 1, %s9
    %p138 = scmp.lt.s32.totalorder %s9, 3
    %p139 = pnand %p137, %p138
    %p140 = pneg %p139
    // Predicated region
    $region9: #{_lambda_.7} parent=5 // pred_check
      _
    $region10: #{_lambda_.7} parent=5 // pred_check_branch
      %142 = sbr.rel (%p139) target = $region12
    $region11: #{_lambda_.7} parent=5 // pred_region
      %s143 = ssub.s32 %s9, 1
    $region12: #{_lambda_.7} parent=5 // pred_fallthru
      _
    %p144 = scmp.lt.s32.totalorder %s9, 2
    // Predicated region
    $region13: #{_lambda_.7} parent=5 // pred_check
      %p145 = pneg %p144
    $region14: #{_lambda_.7} parent=5 // pred_check_branch
      %147 = sbr.rel (%p145) target = $region16
    $region15: #{_lambda_.7} parent=5 // pred_region
      // Predicated region
      $region17: #{_lambda_.7} parent=15 // pred_check
        %p148 = pneg %p43
      $region18: #{_lambda_.7} parent=15 // pred_check_branch
        %150 = sbr.rel (%p148) target = $region20
      $region19: #{_lambda_.7} parent=15 // pred_region
        %s151 = smul.u32 4, %s17
        %p152 = scmp.lt.s32.totalorder %s16, 1
        %s153 = scalar_select %p152, %s16, 1
        %p154 = scmp.lt.s32.totalorder %s151, 3
        %s155 = scalar_select %p154, %s151, 3
        %s156 = smul.addr %s153, 4
        %s157 = sadd.s32 %s155, %s156
        %s158 = smul.addr %s157, 4
        %s159 = scalar_lea.vmem %s0, %s158
        %s160 = smul.u32 4, %s17
      $region20: #{_lambda_.7} parent=15 // pred_fallthru
        _
      // Predicated region
      $region21: #{_lambda_.7} parent=15 // pred_check
        %p161 = pneg %p69
      $region22: #{_lambda_.7} parent=15 // pred_check_branch
        %163 = sbr.rel (%p161) target = $region24
      $region23: #{_lambda_.7} parent=15 // pred_region
        %p164 = scmp.lt.s32.totalorder %s16, 1
        %s165 = scalar_select %p164, %s16, 1
        %s166 = scalar_lea.vmem %s1, %s165
      $region24: #{_lambda_.7} parent=15 // pred_fallthru
        _
      // Predicated region
      $region25: #{_lambda_.7} parent=15 // pred_check
        %p167 = pneg %p95
      $region26: #{_lambda_.7} parent=15 // pred_check_branch
        %169 = sbr.rel (%p167) target = $region28
      $region27: #{_lambda_.7} parent=15 // pred_region
        %p170 = scmp.lt.s32.totalorder %s16, 1
        %s171 = scalar_select %p170, %s16, 1
        %s172 = scalar_lea.vmem %s2, %s171
      $region28: #{_lambda_.7} parent=15 // pred_fallthru
        _
    $region16: #{_lambda_.7} parent=5 // pred_fallthru
      _
    %p173 = scmp.le.s32.totalorder 1, %s9
    %p174 = scmp.lt.s32.totalorder %s9, 3
    %p175 = pnand %p173, %p174
    %p176 = pneg %p175
    // Predicated region
    $region29: #{_lambda_.7} parent=5 // pred_check
      _
    $region30: #{_lambda_.7} parent=5 // pred_check_branch
      %178 = sbr.rel (%p175) target = $region32
    $region31: #{_lambda_.7} parent=5 // pred_region
      %s179 = ssub.s32 %s9, 1
      %s180 = smul.u32 4, %s19
      %p181 = scmp.lt.s32.totalorder %s18, 1
      %s182 = scalar_select %p181, %s18, 1
      %p183 = scmp.lt.s32.totalorder %s180, 3
      %s184 = scalar_select %p183, %s180, 3
      %s185 = smul.addr %s182, 4
      %s186 = sadd.s32 %s184, %s185
      %s187 = smul.addr %s186, 4
      %s188 = scalar_lea.vmem %s0, %s187
      %p189 = pneg %p49
      %p190 = pneg %p46
      %p191 = scmp.lt.s32.totalorder %s18, 1
      %s192 = scalar_select %p191, %s18, 1
      %s193 = scalar_lea.vmem %s1, %s192
      %p194 = pneg %p75
      %p195 = pneg %p72
      %p196 = scmp.lt.s32.totalorder %s18, 1
      %s197 = scalar_select %p196, %s18, 1
      %s198 = scalar_lea.vmem %s2, %s197
      %p199 = pneg %p101
      %p200 = pneg %p98
      %p201 = pneg %p129
      %p202 = pneg %p126
      %s203 = smul.u32 4, %s19
      %p204 = scmp.lt.s32.totalorder %s18, 1
      %s205 = scalar_select %p204, %s18, 1
      %p206 = scmp.lt.s32.totalorder %s203, 3
      %s207 = scalar_select %p206, %s203, 3
      %s208 = smul.addr %s205, 4
      %s209 = sadd.s32 %s207, %s208
      %s210 = smul.addr %s209, 4
      %s211 = scalar_lea.vmem %s3, %s210
      %s212 = smul.u32 4, %s19
      %p213 = scmp.lt.s32.totalorder %s18, 1
      %s214 = scalar_select %p213, %s18, 1
      %p215 = scmp.lt.s32.totalorder %s212, 3
      %s216 = scalar_select %p215, %s212, 3
      %s217 = smul.addr %s214, 4
      %s218 = sadd.s32 %s216, %s217
      %s219 = smul.addr %s218, 4
      %s220 = scalar_lea.vmem %s0, %s219
      %s221 = smul.u32 4, %s19
      %p222 = scmp.lt.s32.totalorder %s18, 1
      %s223 = scalar_select %p222, %s18, 1
      %s224 = scalar_lea.vmem %s1, %s223
      %p225 = scmp.lt.s32.totalorder %s18, 1
      %s226 = scalar_select %p225, %s18, 1
      %s227 = scalar_lea.vmem %s2, %s226
      %s228 = smul.u32 4, %s19
      %p229 = scmp.lt.s32.totalorder %s18, 1
      %s230 = scalar_select %p229, %s18, 1
      %p231 = scmp.lt.s32.totalorder %s228, 3
      %s232 = scalar_select %p231, %s228, 3
      %s233 = smul.addr %s230, 4
      %s234 = sadd.s32 %s232, %s233
      %s235 = smul.addr %s234, 4
      %s236 = scalar_lea.vmem %s3, %s235
      %s237 = smul.u32 4, %s19
      %v238 = vld [vmem:[%s220] sm:$0xf]
      %v239 = vld [vmem:[%s220 + $0x4] sm:$0xf]
      %v240 = vld [vmem:[%s220 + $0x8] sm:$0xf]
      %v241 = vld [vmem:[%s220 + $0xc] sm:$0xf]
      %v242 = vunpack.c.l.bf16 %v238
      %v243 = vunpack.c.l.bf16 %v239
      %v244 = vunpack.c.l.bf16 %v240
      %v245 = vunpack.c.l.bf16 %v241
      %v246 = vld [vmem:[%s224] sm:$0x1]
      %v248 = vperm.slane %v246, 0
      %v250 = vmul.f32 %v242, %v248
      %v251 = vmul.f32 %v243, %v248
      %v252 = vmul.f32 %v244, %v248
      %v253 = vmul.f32 %v245, %v248
      %v254 = vld [vmem:[%s227] sm:$0x1]
      %v256 = vperm.slane %v254, 0
      %v258 = vadd.f32 %v250, %v256
      %v259 = vadd.f32 %v251, %v256
      %v260 = vadd.f32 %v252, %v256
      %v261 = vadd.f32 %v253, %v256
      %v262 = vmax.f32 %v258, 0.0
      %v263 = vmax.f32 %v259, 0.0
      %v264 = vmax.f32 %v260, 0.0
      %v265 = vmax.f32 %v261, 0.0
      %v266 = vpack.c.bf16 %v262, %v262
      %v267 = vpack.c.bf16 %v263, %v263
      %v268 = vpack.c.bf16 %v264, %v264
      %v269 = vpack.c.bf16 %v265, %v265
      %270 = vst [vmem:[%s236] sm:$0xf] %v266
      %271 = vst [vmem:[%s236 + $0x4] sm:$0xf] %v267
      %272 = vst [vmem:[%s236 + $0x8] sm:$0xf] %v268
      %273 = vst [vmem:[%s236 + $0xc] sm:$0xf] %v269
      %s274 = smul.u32 4, %s19
      %p275 = scmp.lt.s32.totalorder %s18, 1
      %s276 = scalar_select %p275, %s18, 1
      %p277 = scmp.lt.s32.totalorder %s274, 3
      %s278 = scalar_select %p277, %s274, 3
      %s279 = smul.addr %s276, 4
      %s280 = sadd.s32 %s278, %s279
      %s281 = smul.addr %s280, 4
      %s282 = scalar_lea.vmem %s3, %s281
      // Predicated region
      $region33: #{_lambda_.7} parent=31 // pred_check
        %p283 = pneg %p126
      $region34: #{_lambda_.7} parent=31 // pred_check_branch
        %285 = sbr.rel (%p283) target = $region36
      $region35: #{_lambda_.7} parent=31 // pred_region
        %s286 = smul.u32 4, %s19
      $region36: #{_lambda_.7} parent=31 // pred_fallthru
        _
    $region32: #{_lambda_.7} parent=5 // pred_fallthru
      _
    %p287 = scmp.le.s32.totalorder 2, %s9
    // Predicated region
    $region37: #{_lambda_.7} parent=5 // pred_check
      %p288 = pneg %p287
    $region38: #{_lambda_.7} parent=5 // pred_check_branch
      %290 = sbr.rel (%p288) target = $region40
    $region39: #{_lambda_.7} parent=5 // pred_region
      %s291 = ssub.s32 %s9, 2
      // Predicated region
      $region41: #{_lambda_.7} parent=39 // pred_check
        %p292 = pneg %p132
      $region42: #{_lambda_.7} parent=39 // pred_check_branch
        %294 = sbr.rel (%p292) target = $region44
      $region43: #{_lambda_.7} parent=39 // pred_region
        %s295 = smul.u32 4, %s21
        %p296 = scmp.lt.s32.totalorder %s20, 1
        %s297 = scalar_select %p296, %s20, 1
        %p298 = scmp.lt.s32.totalorder %s295, 3
        %s299 = scalar_select %p298, %s295, 3
        %s300 = smul.addr %s297, 4
        %s301 = sadd.s32 %s299, %s300
        %s302 = smul.addr %s301, 4
        %s303 = scalar_lea.vmem %s3, %s302
      $region44: #{_lambda_.7} parent=39 // pred_fallthru
        _
    $region40: #{_lambda_.7} parent=5 // pred_fallthru
      _
  $region6: #{_lambda_.7} parent=0 // loop_footer
    %s13 = sadd.s32 1, %s9
  $region7: #{_lambda_.7} parent=0 // loop_footer_branch
    %8 = sbr.rel target = $region3
  $region8: #{_lambda_.7} parent=0 // loop_exit
    _

// kernel: _lambda_.6
$region0: #{_lambda_.6}
  #allocation0 [shape = 'u32[]', space=smem, size = 0x4, offset = 0x4, fixed_abs, tag = 'smem constant byte address 0x4 - core index']
  #allocation1 [shape = 'u32[72,128]{1,0:T(1,128)}', space=vmem, size = 0x9000, scoped, tag = 'internal scratch']
  %s0 = inlined_call_operand.vmem [shape: bf16[512,128], index: 0, kind: input, shape index: {}]
  %s1 = inlined_call_operand.hbm [shape: bf16[128,128], index: 1, kind: input, shape index: {}]
  %s2 = inlined_call_operand.vmem [shape: bf16[512,128], index: 2, kind: output, shape index: {}]
  %s3 = sld [smem:[#allocation0]]
  $region22: #{_lambda_.6} parent=0
    _
  %s5 = ssub.s32 1, %s3
  %s6 = scalar_select 0, %s5, %s3
  $region1: #{_lambda_.6} parent=0
    #allocation2 [shape = 'u8[32768]{0}', space=vmem, size = 0x8000, scoped, tag = 'input window, operand 1, single buffered']
    #allocation3 [shape = 's32[1]{0}', space=sflag, size = 0x4, scoped, tag = 'scoped memory for _lambda_.6']
    %7 = vsyncpa [#allocation3], 0
    // Predicated region
    $region2: #{_lambda_.6} parent=1 // pred_check
      _
    $region3: #{_lambda_.6} parent=1 // pred_check_branch
      %9 = sbr.rel (0) target = $region5
    $region4: #{_lambda_.6} parent=1 // pred_region
      _
    $region5: #{_lambda_.6} parent=1 // pred_fallthru
      _
    // Predicated region
    $region6: #{_lambda_.6} parent=1 // pred_check
      _
    $region7: #{_lambda_.6} parent=1 // pred_check_branch
      %11 = sbr.rel (0) target = $region9
    $region8: #{_lambda_.6} parent=1 // pred_region
      %13 = vsyncadd [#allocation3], 0
      %s14 = sshll.u32 %s1, 4
      %s15 = int_to_ptr.hbm [resolvable:$true] %s14
      %s16 = sshll.u32 [#allocation2], 4
      %s17 = int_to_ptr.vmem [resolvable:$true] %s16
      %22 = dma.hbm_to_vmem [thread:$0]  %s15, 1024, %s17, [#allocation3], 64, 64, 4
    $region9: #{_lambda_.6} parent=1 // pred_fallthru
      _
    // Predicated region
    $region10: #{_lambda_.6} parent=1 // pred_check
      _
    $region11: #{_lambda_.6} parent=1 // pred_check_branch
      %24 = sbr.rel (0) target = $region13
    $region12: #{_lambda_.6} parent=1 // pred_region
      %26 = dma.done [#allocation3], 1024
    $region13: #{_lambda_.6} parent=1 // pred_fallthru
      _
    %v27 = vld [vmem:[%s0] sm:$0xf]
    %v28 = vld [vmem:[%s0 + $0x4] sm:$0xf]
    %v29 = vld [vmem:[%s0 + $0x8] sm:$0xf]
    %v30 = vld [vmem:[%s0 + $0xc] sm:$0xf]
    %v31 = vld [vmem:[%s0 + $0x10] sm:$0xf]
    %v32 = vld [vmem:[%s0 + $0x14] sm:$0xf]
    %v33 = vld [vmem:[%s0 + $0x18] sm:$0xf]
    %v34 = vld [vmem:[%s0 + $0x1c] sm:$0xf]
    %v35 = vld [vmem:[%s0 + $0x20] sm:$0xf]
    %v36 = vld [vmem:[%s0 + $0x24] sm:$0xf]
    %v37 = vld [vmem:[%s0 + $0x28] sm:$0xf]
    %v38 = vld [vmem:[%s0 + $0x2c] sm:$0xf]
    %v39 = vld [vmem:[%s0 + $0x30] sm:$0xf]
    %v40 = vld [vmem:[%s0 + $0x34] sm:$0xf]
    %v41 = vld [vmem:[%s0 + $0x38] sm:$0xf]
    %v42 = vld [vmem:[%s0 + $0x3c] sm:$0xf]
    %v43 = vld [vmem:[%s0 + $0x40] sm:$0xf]
    %v44 = vld [vmem:[%s0 + $0x44] sm:$0xf]
    %v45 = vld [vmem:[%s0 + $0x48] sm:$0xf]
    %v46 = vld [vmem:[%s0 + $0x4c] sm:$0xf]
    %v47 = vld [vmem:[%s0 + $0x50] sm:$0xf]
    %v48 = vld [vmem:[%s0 + $0x54] sm:$0xf]
    %v49 = vld [vmem:[%s0 + $0x58] sm:$0xf]
    %v50 = vld [vmem:[%s0 + $0x5c] sm:$0xf]
    %v51 = vld [vmem:[%s0 + $0x60] sm:$0xf]
    %v52 = vld [vmem:[%s0 + $0x64] sm:$0xf]
    %v53 = vld [vmem:[%s0 + $0x68] sm:$0xf]
    %v54 = vld [vmem:[%s0 + $0x6c] sm:$0xf]
    %v55 = vld [vmem:[%s0 + $0x70] sm:$0xf]
    %v56 = vld [vmem:[%s0 + $0x74] sm:$0xf]
    %v57 = vld [vmem:[%s0 + $0x78] sm:$0xf]
    %v58 = vld [vmem:[%s0 + $0x7c] sm:$0xf]
    %v59 = vld [vmem:[%s0 + $0x80] sm:$0xf]
    %v60 = vld [vmem:[%s0 + $0x84] sm:$0xf]
    %v61 = vld [vmem:[%s0 + $0x88] sm:$0xf]
    %v62 = vld [vmem:[%s0 + $0x8c] sm:$0xf]
    %v63 = vld [vmem:[%s0 + $0x90] sm:$0xf]
    %v64 = vld [vmem:[%s0 + $0x94] sm:$0xf]
    %v65 = vld [vmem:[%s0 + $0x98] sm:$0xf]
    %v66 = vld [vmem:[%s0 + $0x9c] sm:$0xf]
    %v67 = vld [vmem:[%s0 + $0xa0] sm:$0xf]
    %v68 = vld [vmem:[%s0 + $0xa4] sm:$0xf]
    %v69 = vld [vmem:[%s0 + $0xa8] sm:$0xf]
    %v70 = vld [vmem:[%s0 + $0xac] sm:$0xf]
    %v71 = vld [vmem:[%s0 + $0xb0] sm:$0xf]
    %v72 = vld [vmem:[%s0 + $0xb4] sm:$0xf]
    %v73 = vld [vmem:[%s0 + $0xb8] sm:$0xf]
    %v74 = vld [vmem:[%s0 + $0xbc] sm:$0xf]
    %v75 = vld [vmem:[%s0 + $0xc0] sm:$0xf]
    %v76 = vld [vmem:[%s0 + $0xc4] sm:$0xf]
    %v77 = vld [vmem:[%s0 + $0xc8] sm:$0xf]
    %v78 = vld [vmem:[%s0 + $0xcc] sm:$0xf]
    %v79 = vld [vmem:[%s0 + $0xd0] sm:$0xf]
    %v80 = vld [vmem:[%s0 + $0xd4] sm:$0xf]
    %v81 = vld [vmem:[%s0 + $0xd8] sm:$0xf]
    %v82 = vld [vmem:[%s0 + $0xdc] sm:$0xf]
    %v83 = vld [vmem:[%s0 + $0xe0] sm:$0xf]
    %v84 = vld [vmem:[%s0 + $0xe4] sm:$0xf]
    %v85 = vld [vmem:[%s0 + $0xe8] sm:$0xf]
    %v86 = vld [vmem:[%s0 + $0xec] sm:$0xf]
    %v87 = vld [vmem:[%s0 + $0xf0] sm:$0xf]
    %v88 = vld [vmem:[%s0 + $0xf4] sm:$0xf]
    %v89 = vld [vmem:[%s0 + $0xf8] sm:$0xf]
    %v90 = vld [vmem:[%s0 + $0xfc] sm:$0xf]
    %v91 = vld [vmem:[#allocation2] sm:$0xf]
    %v92 = vld [vmem:[#allocation2 + $0x4] sm:$0xf]
    %v93 = vld [vmem:[#allocation2 + $0x8] sm:$0xf]
    %v94 = vld [vmem:[#allocation2 + $0xc] sm:$0xf]
    %v95 = vld [vmem:[#allocation2 + $0x10] sm:$0xf]
    %v96 = vld [vmem:[#allocation2 + $0x14] sm:$0xf]
    %v97 = vld [vmem:[#allocation2 + $0x18] sm:$0xf]
    %v98 = vld [vmem:[#allocation2 + $0x1c] sm:$0xf]
    %v99 = vld [vmem:[#allocation2 + $0x20] sm:$0xf]
    %v100 = vld [vmem:[#allocation2 + $0x24] sm:$0xf]
    %v101 = vld [vmem:[#allocation2 + $0x28] sm:$0xf]
    %v102 = vld [vmem:[#allocation2 + $0x2c] sm:$0xf]
    %v103 = vld [vmem:[#allocation2 + $0x30] sm:$0xf]
    %v104 = vld [vmem:[#allocation2 + $0x34] sm:$0xf]
    %v105 = vld [vmem:[#allocation2 + $0x38] sm:$0xf]
    %v106 = vld [vmem:[#allocation2 + $0x3c] sm:$0xf]
    %v171 = vunpack.c.l.b16 %v27
    %v172 = vunpack.c.l.b16 %v28
    %v173 = vunpack.c.l.b16 %v29
    %v174 = vunpack.c.l.b16 %v30
    %v175 = vunpack.c.l.b16 %v31
    %v176 = vunpack.c.l.b16 %v32
    %v177 = vunpack.c.l.b16 %v33
    %v178 = vunpack.c.l.b16 %v34
    %v179 = vunpack.c.l.b16 %v35
    %v180 = vunpack.c.l.b16 %v36
    %v181 = vunpack.c.l.b16 %v37
    %v182 = vunpack.c.l.b16 %v38
    %v183 = vunpack.c.l.b16 %v39
    %v184 = vunpack.c.l.b16 %v40
    %v185 = vunpack.c.l.b16 %v41
    %v186 = vunpack.c.l.b16 %v42
    %v187 = vunpack.c.l.b16 %v43
    %v188 = vunpack.c.l.b16 %v44
    %v189 = vunpack.c.l.b16 %v45
    %v190 = vunpack.c.l.b16 %v46
    %v191 = vunpack.c.l.b16 %v47
    %v192 = vunpack.c.l.b16 %v48
    %v193 = vunpack.c.l.b16 %v49
    %v194 = vunpack.c.l.b16 %v50
    %v195 = vunpack.c.l.b16 %v51
    %v196 = vunpack.c.l.b16 %v52
    %v197 = vunpack.c.l.b16 %v53
    %v198 = vunpack.c.l.b16 %v54
    %v199 = vunpack.c.l.b16 %v55
    %v200 = vunpack.c.l.b16 %v56
    %v201 = vunpack.c.l.b16 %v57
    %v202 = vunpack.c.l.b16 %v58
    %v203 = vunpack.c.l.b16 %v59
    %v204 = vunpack.c.l.b16 %v60
    %v205 = vunpack.c.l.b16 %v61
    %v206 = vunpack.c.l.b16 %v62
    %v207 = vunpack.c.l.b16 %v63
    %v208 = vunpack.c.l.b16 %v64
    %v209 = vunpack.c.l.b16 %v65
    %v210 = vunpack.c.l.b16 %v66
    %v211 = vunpack.c.l.b16 %v67
    %v212 = vunpack.c.l.b16 %v68
    %v213 = vunpack.c.l.b16 %v69
    %v214 = vunpack.c.l.b16 %v70
    %v215 = vunpack.c.l.b16 %v71
    %v216 = vunpack.c.l.b16 %v72
    %v217 = vunpack.c.l.b16 %v73
    %v218 = vunpack.c.l.b16 %v74
    %v219 = vunpack.c.l.b16 %v75
    %v220 = vunpack.c.l.b16 %v76
    %v221 = vunpack.c.l.b16 %v77
    %v222 = vunpack.c.l.b16 %v78
    %v223 = vunpack.c.l.b16 %v79
    %v224 = vunpack.c.l.b16 %v80
    %v225 = vunpack.c.l.b16 %v81
    %v226 = vunpack.c.l.b16 %v82
    %v227 = vunpack.c.l.b16 %v83
    %v228 = vunpack.c.l.b16 %v84
    %v229 = vunpack.c.l.b16 %v85
    %v230 = vunpack.c.l.b16 %v86
    %v231 = vunpack.c.l.b16 %v87
    %v232 = vunpack.c.l.b16 %v88
    %v233 = vunpack.c.l.b16 %v89
    %v234 = vunpack.c.l.b16 %v90
    %v235 = vpack.c.b16 %v172, %v171
    %v236 = vpack.c.b16 %v174, %v173
    %v237 = vpack.c.b16 %v176, %v175
    %v238 = vpack.c.b16 %v178, %v177
    %v239 = vpack.c.b16 %v180, %v179
    %v240 = vpack.c.b16 %v182, %v181
    %v241 = vpack.c.b16 %v184, %v183
    %v242 = vpack.c.b16 %v186, %v185
    %v243 = vpack.c.b16 %v188, %v187
    %v244 = vpack.c.b16 %v190, %v189
    %v245 = vpack.c.b16 %v192, %v191
    %v246 = vpack.c.b16 %v194, %v193
    %v247 = vpack.c.b16 %v196, %v195
    %v248 = vpack.c.b16 %v198, %v197
    %v249 = vpack.c.b16 %v200, %v199
    %v250 = vpack.c.b16 %v202, %v201
    %v251 = vpack.c.b16 %v204, %v203
    %v252 = vpack.c.b16 %v206, %v205
    %v253 = vpack.c.b16 %v208, %v207
    %v254 = vpack.c.b16 %v210, %v209
    %v255 = vpack.c.b16 %v212, %v211
    %v256 = vpack.c.b16 %v214, %v213
    %v257 = vpack.c.b16 %v216, %v215
    %v258 = vpack.c.b16 %v218, %v217
    %v259 = vpack.c.b16 %v220, %v219
    %v260 = vpack.c.b16 %v222, %v221
    %v261 = vpack.c.b16 %v224, %v223
    %v262 = vpack.c.b16 %v226, %v225
    %v263 = vpack.c.b16 %v228, %v227
    %v264 = vpack.c.b16 %v230, %v229
    %v265 = vpack.c.b16 %v232, %v231
    %v266 = vpack.c.b16 %v234, %v233
    %v315 = vunpack.c.l.b16 %v91
    %v316 = vunpack.c.l.b16 %v92
    %v317 = vunpack.c.l.b16 %v93
    %v318 = vunpack.c.l.b16 %v94
    %v319 = vunpack.c.l.b16 %v95
    %v320 = vunpack.c.l.b16 %v96
    %v321 = vunpack.c.l.b16 %v97
    %v322 = vunpack.c.l.b16 %v98
    %v323 = vunpack.c.l.b16 %v99
    %v324 = vunpack.c.l.b16 %v100
    %v325 = vunpack.c.l.b16 %v101
    %v326 = vunpack.c.l.b16 %v102
    %v327 = vunpack.c.l.b16 %v103
    %v328 = vunpack.c.l.b16 %v104
    %v329 = vunpack.c.l.b16 %v105
    %v330 = vunpack.c.l.b16 %v106
    %v331 = vpack.c.b16 %v316, %v315
    %v332 = vpack.c.b16 %v318, %v317
    %v333 = vpack.c.b16 %v320, %v319
    %v334 = vpack.c.b16 %v322, %v321
    %v335 = vpack.c.b16 %v324, %v323
    %v336 = vpack.c.b16 %v326, %v325
    %v337 = vpack.c.b16 %v328, %v327
    %v338 = vpack.c.b16 %v330, %v329
    %347 = vmatpush.bf16.msra.mxu0 %v338
    %348 = vmatpush.bf16.msra.mxu0 %v337
    %349 = vmatpush.bf16.msra.mxu0 %v336
    %350 = vmatpush.bf16.msra.mxu0 %v335
    %351 = vmatpush.bf16.msra.mxu0 %v334
    %352 = vmatpush.bf16.msra.mxu0 %v333
    %353 = vmatpush.bf16.msra.mxu0 %v332
    %354 = vmatpush.bf16.msra.mxu0 %v331
    %355 = vmatmul.bf16.gmra.mxu0 %v235
    %v356 = vpop.f32.mrf.mxu0
    %v357 = vadd.f32 0.0, %v356
    %v358 = vpop.f32.mrf.mxu0
    %v359 = vadd.f32 0.0, %v358
    %360 = vmatmul.bf16.gmra.mxu0 %v236
    %v361 = vpop.f32.mrf.mxu0
    %v362 = vadd.f32 0.0, %v361
    %v363 = vpop.f32.mrf.mxu0
    %v364 = vadd.f32 0.0, %v363
    %365 = vmatmul.bf16.gmra.mxu0 %v237
    %v366 = vpop.f32.mrf.mxu0
    %v367 = vadd.f32 0.0, %v366
    %v368 = vpop.f32.mrf.mxu0
    %v369 = vadd.f32 0.0, %v368
    %370 = vmatmul.bf16.gmra.mxu0 %v238
    %v371 = vpop.f32.mrf.mxu0
    %v372 = vadd.f32 0.0, %v371
    %v373 = vpop.f32.mrf.mxu0
    %v374 = vadd.f32 0.0, %v373
    %375 = vmatmul.bf16.gmra.mxu0 %v239
    %v376 = vpop.f32.mrf.mxu0
    %v377 = vadd.f32 0.0, %v376
    %v378 = vpop.f32.mrf.mxu0
    %v379 = vadd.f32 0.0, %v378
    %380 = vmatmul.bf16.gmra.mxu0 %v240
    %v381 = vpop.f32.mrf.mxu0
    %v382 = vadd.f32 0.0, %v381
    %v383 = vpop.f32.mrf.mxu0
    %v384 = vadd.f32 0.0, %v383
    %385 = vmatmul.bf16.gmra.mxu0 %v241
    %v386 = vpop.f32.mrf.mxu0
    %v387 = vadd.f32 0.0, %v386
    %v388 = vpop.f32.mrf.mxu0
    %v389 = vadd.f32 0.0, %v388
    %390 = vmatmul.bf16.gmra.mxu0 %v242
    %v391 = vpop.f32.mrf.mxu0
    %v392 = vadd.f32 0.0, %v391
    %v393 = vpop.f32.mrf.mxu0
    %v394 = vadd.f32 0.0, %v393
    %395 = vmatmul.bf16.gmra.mxu0 %v243
    %v396 = vpop.f32.mrf.mxu0
    %v397 = vadd.f32 0.0, %v396
    %v398 = vpop.f32.mrf.mxu0
    %v399 = vadd.f32 0.0, %v398
    %400 = vmatmul.bf16.gmra.mxu0 %v244
    %v401 = vpop.f32.mrf.mxu0
    %v402 = vadd.f32 0.0, %v401
    %v403 = vpop.f32.mrf.mxu0
    %v404 = vadd.f32 0.0, %v403
    %405 = vmatmul.bf16.gmra.mxu0 %v245
    %v406 = vpop.f32.mrf.mxu0
    %v407 = vadd.f32 0.0, %v406
    %v408 = vpop.f32.mrf.mxu0
    %v409 = vadd.f32 0.0, %v408
    %410 = vmatmul.bf16.gmra.mxu0 %v246
    %v411 = vpop.f32.mrf.mxu0
    %v412 = vadd.f32 0.0, %v411
    %v413 = vpop.f32.mrf.mxu0
    %v414 = vadd.f32 0.0, %v413
    %415 = vmatmul.bf16.gmra.mxu0 %v247
    %v416 = vpop.f32.mrf.mxu0
    %v417 = vadd.f32 0.0, %v416
    %v418 = vpop.f32.mrf.mxu0
    %v419 = vadd.f32 0.0, %v418
    %420 = vmatmul.bf16.gmra.mxu0 %v248
    %v421 = vpop.f32.mrf.mxu0
    %v422 = vadd.f32 0.0, %v421
    %v423 = vpop.f32.mrf.mxu0
    %v424 = vadd.f32 0.0, %v423
    %425 = vmatmul.bf16.gmra.mxu0 %v249
    %v426 = vpop.f32.mrf.mxu0
    %v427 = vadd.f32 0.0, %v426
    %v428 = vpop.f32.mrf.mxu0
    %v429 = vadd.f32 0.0, %v428
    %430 = vmatmul.bf16.gmra.mxu0 %v250
    %v431 = vpop.f32.mrf.mxu0
    %v432 = vadd.f32 0.0, %v431
    %v433 = vpop.f32.mrf.mxu0
    %v434 = vadd.f32 0.0, %v433
    %435 = vmatmul.bf16.gmra.mxu0 %v251
    %v436 = vpop.f32.mrf.mxu0
    %v437 = vadd.f32 0.0, %v436
    %v438 = vpop.f32.mrf.mxu0
    %v439 = vadd.f32 0.0, %v438
    %440 = vmatmul.bf16.gmra.mxu0 %v252
    %v441 = vpop.f32.mrf.mxu0
    %v442 = vadd.f32 0.0, %v441
    %v443 = vpop.f32.mrf.mxu0
    %v444 = vadd.f32 0.0, %v443
    %445 = vmatmul.bf16.gmra.mxu0 %v253
    %v446 = vpop.f32.mrf.mxu0
    %v447 = vadd.f32 0.0, %v446
    %v448 = vpop.f32.mrf.mxu0
    %v449 = vadd.f32 0.0, %v448
    %450 = vmatmul.bf16.gmra.mxu0 %v254
    %v451 = vpop.f32.mrf.mxu0
    %v452 = vadd.f32 0.0, %v451
    %v453 = vpop.f32.mrf.mxu0
    %v454 = vadd.f32 0.0, %v453
    %455 = vmatmul.bf16.gmra.mxu0 %v255
    %v456 = vpop.f32.mrf.mxu0
    %v457 = vadd.f32 0.0, %v456
    %v458 = vpop.f32.mrf.mxu0
    %v459 = vadd.f32 0.0, %v458
    %460 = vmatmul.bf16.gmra.mxu0 %v256
    %v461 = vpop.f32.mrf.mxu0
    %v462 = vadd.f32 0.0, %v461
    %v463 = vpop.f32.mrf.mxu0
    %v464 = vadd.f32 0.0, %v463
    %465 = vmatmul.bf16.gmra.mxu0 %v257
    %v466 = vpop.f32.mrf.mxu0
    %v467 = vadd.f32 0.0, %v466
    %v468 = vpop.f32.mrf.mxu0
    %v469 = vadd.f32 0.0, %v468
    %470 = vmatmul.bf16.gmra.mxu0 %v258
    %v471 = vpop.f32.mrf.mxu0
    %v472 = vadd.f32 0.0, %v471
    %v473 = vpop.f32.mrf.mxu0
    %v474 = vadd.f32 0.0, %v473
    %475 = vmatmul.bf16.gmra.mxu0 %v259
    %v476 = vpop.f32.mrf.mxu0
    %v477 = vadd.f32 0.0, %v476
    %v478 = vpop.f32.mrf.mxu0
    %v479 = vadd.f32 0.0, %v478
    %480 = vmatmul.bf16.gmra.mxu0 %v260
    %v481 = vpop.f32.mrf.mxu0
    %v482 = vadd.f32 0.0, %v481
    %v483 = vpop.f32.mrf.mxu0
    %v484 = vadd.f32 0.0, %v483
    %485 = vmatmul.bf16.gmra.mxu0 %v261
    %v486 = vpop.f32.mrf.mxu0
    %v487 = vadd.f32 0.0, %v486
    %v488 = vpop.f32.mrf.mxu0
    %v489 = vadd.f32 0.0, %v488
    %490 = vmatmul.bf16.gmra.mxu0 %v262
    %v491 = vpop.f32.mrf.mxu0
    %v492 = vadd.f32 0.0, %v491
    %v493 = vpop.f32.mrf.mxu0
    %v494 = vadd.f32 0.0, %v493
    %495 = vmatmul.bf16.gmra.mxu0 %v263
    %v496 = vpop.f32.mrf.mxu0
    %v497 = vadd.f32 0.0, %v496
    %v498 = vpop.f32.mrf.mxu0
    %v499 = vadd.f32 0.0, %v498
    %500 = vmatmul.bf16.gmra.mxu0 %v264
    %v501 = vpop.f32.mrf.mxu0
    %v502 = vadd.f32 0.0, %v501
    %v503 = vpop.f32.mrf.mxu0
    %v504 = vadd.f32 0.0, %v503
    %505 = vmatmul.bf16.gmra.mxu0 %v265
    %v506 = vpop.f32.mrf.mxu0
    %v507 = vadd.f32 0.0, %v506
    %v508 = vpop.f32.mrf.mxu0
    %v509 = vadd.f32 0.0, %v508
    %510 = vmatmul.bf16.gmra.mxu0 %v266
    %v511 = vpop.f32.mrf.mxu0
    %v512 = vadd.f32 0.0, %v511
    %v513 = vpop.f32.mrf.mxu0
    %v514 = vadd.f32 0.0, %v513
    %515 = vdwg.mxu0
    %v516 = vpack.c.bf16 %v357, %v357
    %v517 = vpack.c.bf16 %v359, %v359
    %v518 = vpack.c.bf16 %v362, %v362
    %v519 = vpack.c.bf16 %v364, %v364
    %v520 = vpack.c.bf16 %v367, %v367
    %v521 = vpack.c.bf16 %v369, %v369
    %v522 = vpack.c.bf16 %v372, %v372
    %v523 = vpack.c.bf16 %v374, %v374
    %v524 = vpack.c.bf16 %v377, %v377
    %v525 = vpack.c.bf16 %v379, %v379
    %v526 = vpack.c.bf16 %v382, %v382
    %v527 = vpack.c.bf16 %v384, %v384
    %v528 = vpack.c.bf16 %v387, %v387
    %v529 = vpack.c.bf16 %v389, %v389
    %v530 = vpack.c.bf16 %v392, %v392
    %v531 = vpack.c.bf16 %v394, %v394
    %v532 = vpack.c.bf16 %v397, %v397
    %v533 = vpack.c.bf16 %v399, %v399
    %v534 = vpack.c.bf16 %v402, %v402
    %v535 = vpack.c.bf16 %v404, %v404
    %v536 = vpack.c.bf16 %v407, %v407
    %v537 = vpack.c.bf16 %v409, %v409
    %v538 = vpack.c.bf16 %v412, %v412
    %v539 = vpack.c.bf16 %v414, %v414
    %v540 = vpack.c.bf16 %v417, %v417
    %v541 = vpack.c.bf16 %v419, %v419
    %v542 = vpack.c.bf16 %v422, %v422
    %v543 = vpack.c.bf16 %v424, %v424
    %v544 = vpack.c.bf16 %v427, %v427
    %v545 = vpack.c.bf16 %v429, %v429
    %v546 = vpack.c.bf16 %v432, %v432
    %v547 = vpack.c.bf16 %v434, %v434
    %v548 = vpack.c.bf16 %v437, %v437
    %v549 = vpack.c.bf16 %v439, %v439
    %v550 = vpack.c.bf16 %v442, %v442
    %v551 = vpack.c.bf16 %v444, %v444
    %v552 = vpack.c.bf16 %v447, %v447
    %v553 = vpack.c.bf16 %v449, %v449
    %v554 = vpack.c.bf16 %v452, %v452
    %v555 = vpack.c.bf16 %v454, %v454
    %v556 = vpack.c.bf16 %v457, %v457
    %v557 = vpack.c.bf16 %v459, %v459
    %v558 = vpack.c.bf16 %v462, %v462
    %v559 = vpack.c.bf16 %v464, %v464
    %v560 = vpack.c.bf16 %v467, %v467
    %v561 = vpack.c.bf16 %v469, %v469
    %v562 = vpack.c.bf16 %v472, %v472
    %v563 = vpack.c.bf16 %v474, %v474
    %v564 = vpack.c.bf16 %v477, %v477
    %v565 = vpack.c.bf16 %v479, %v479
    %v566 = vpack.c.bf16 %v482, %v482
    %v567 = vpack.c.bf16 %v484, %v484
    %v568 = vpack.c.bf16 %v487, %v487
    %v569 = vpack.c.bf16 %v489, %v489
    %v570 = vpack.c.bf16 %v492, %v492
    %v571 = vpack.c.bf16 %v494, %v494
    %v572 = vpack.c.bf16 %v497, %v497
    %v573 = vpack.c.bf16 %v499, %v499
    %v574 = vpack.c.bf16 %v502, %v502
    %v575 = vpack.c.bf16 %v504, %v504
    %v576 = vpack.c.bf16 %v507, %v507
    %v577 = vpack.c.bf16 %v509, %v509
    %v578 = vpack.c.bf16 %v512, %v512
    %v579 = vpack.c.bf16 %v514, %v514
    %580 = vst [vmem:[%s2] sm:$0xf] %v516
    %581 = vst [vmem:[%s2 + $0x4] sm:$0xf] %v517
    %582 = vst [vmem:[%s2 + $0x8] sm:$0xf] %v518
    %583 = vst [vmem:[%s2 + $0xc] sm:$0xf] %v519
    %584 = vst [vmem:[%s2 + $0x10] sm:$0xf] %v520
    %585 = vst [vmem:[%s2 + $0x14] sm:$0xf] %v521
    %586 = vst [vmem:[%s2 + $0x18] sm:$0xf] %v522
    %587 = vst [vmem:[%s2 + $0x1c] sm:$0xf] %v523
    %588 = vst [vmem:[%s2 + $0x20] sm:$0xf] %v524
    %589 = vst [vmem:[%s2 + $0x24] sm:$0xf] %v525
    %590 = vst [vmem:[%s2 + $0x28] sm:$0xf] %v526
    %591 = vst [vmem:[%s2 + $0x2c] sm:$0xf] %v527
    %592 = vst [vmem:[%s2 + $0x30] sm:$0xf] %v528
    %593 = vst [vmem:[%s2 + $0x34] sm:$0xf] %v529
    %594 = vst [vmem:[%s2 + $0x38] sm:$0xf] %v530
    %595 = vst [vmem:[%s2 + $0x3c] sm:$0xf] %v531
    %596 = vst [vmem:[%s2 + $0x40] sm:$0xf] %v532
    %597 = vst [vmem:[%s2 + $0x44] sm:$0xf] %v533
    %598 = vst [vmem:[%s2 + $0x48] sm:$0xf] %v534
    %599 = vst [vmem:[%s2 + $0x4c] sm:$0xf] %v535
    %600 = vst [vmem:[%s2 + $0x50] sm:$0xf] %v536
    %601 = vst [vmem:[%s2 + $0x54] sm:$0xf] %v537
    %602 = vst [vmem:[%s2 + $0x58] sm:$0xf] %v538
    %603 = vst [vmem:[%s2 + $0x5c] sm:$0xf] %v539
    %604 = vst [vmem:[%s2 + $0x60] sm:$0xf] %v540
    %605 = vst [vmem:[%s2 + $0x64] sm:$0xf] %v541
    %606 = vst [vmem:[%s2 + $0x68] sm:$0xf] %v542
    %607 = vst [vmem:[%s2 + $0x6c] sm:$0xf] %v543
    %608 = vst [vmem:[%s2 + $0x70] sm:$0xf] %v544
    %609 = vst [vmem:[%s2 + $0x74] sm:$0xf] %v545
    %610 = vst [vmem:[%s2 + $0x78] sm:$0xf] %v546
    %611 = vst [vmem:[%s2 + $0x7c] sm:$0xf] %v547
    %612 = vst [vmem:[%s2 + $0x80] sm:$0xf] %v548
    %613 = vst [vmem:[%s2 + $0x84] sm:$0xf] %v549
    %614 = vst [vmem:[%s2 + $0x88] sm:$0xf] %v550
    %615 = vst [vmem:[%s2 + $0x8c] sm:$0xf] %v551
    %616 = vst [vmem:[%s2 + $0x90] sm:$0xf] %v552
    %617 = vst [vmem:[%s2 + $0x94] sm:$0xf] %v553
    %618 = vst [vmem:[%s2 + $0x98] sm:$0xf] %v554
    %619 = vst [vmem:[%s2 + $0x9c] sm:$0xf] %v555
    %620 = vst [vmem:[%s2 + $0xa0] sm:$0xf] %v556
    %621 = vst [vmem:[%s2 + $0xa4] sm:$0xf] %v557
    %622 = vst [vmem:[%s2 + $0xa8] sm:$0xf] %v558
    %623 = vst [vmem:[%s2 + $0xac] sm:$0xf] %v559
    %624 = vst [vmem:[%s2 + $0xb0] sm:$0xf] %v560
    %625 = vst [vmem:[%s2 + $0xb4] sm:$0xf] %v561
    %626 = vst [vmem:[%s2 + $0xb8] sm:$0xf] %v562
    %627 = vst [vmem:[%s2 + $0xbc] sm:$0xf] %v563
    %628 = vst [vmem:[%s2 + $0xc0] sm:$0xf] %v564
    %629 = vst [vmem:[%s2 + $0xc4] sm:$0xf] %v565
    %630 = vst [vmem:[%s2 + $0xc8] sm:$0xf] %v566
    %631 = vst [vmem:[%s2 + $0xcc] sm:$0xf] %v567
    %632 = vst [vmem:[%s2 + $0xd0] sm:$0xf] %v568
    %633 = vst [vmem:[%s2 + $0xd4] sm:$0xf] %v569
    %634 = vst [vmem:[%s2 + $0xd8] sm:$0xf] %v570
    %635 = vst [vmem:[%s2 + $0xdc] sm:$0xf] %v571
    %636 = vst [vmem:[%s2 + $0xe0] sm:$0xf] %v572
    %637 = vst [vmem:[%s2 + $0xe4] sm:$0xf] %v573
    %638 = vst [vmem:[%s2 + $0xe8] sm:$0xf] %v574
    %639 = vst [vmem:[%s2 + $0xec] sm:$0xf] %v575
    %640 = vst [vmem:[%s2 + $0xf0] sm:$0xf] %v576
    %641 = vst [vmem:[%s2 + $0xf4] sm:$0xf] %v577
    %642 = vst [vmem:[%s2 + $0xf8] sm:$0xf] %v578
    %643 = vst [vmem:[%s2 + $0xfc] sm:$0xf] %v579
    // Predicated region
    $region14: #{_lambda_.6} parent=1 // pred_check
      _
    $region15: #{_lambda_.6} parent=1 // pred_check_branch
      %645 = sbr.rel (0) target = $region17
    $region16: #{_lambda_.6} parent=1 // pred_region
      _
    $region17: #{_lambda_.6} parent=1 // pred_fallthru
      _
    // Predicated region
    $region18: #{_lambda_.6} parent=1 // pred_check
      _
    $region19: #{_lambda_.6} parent=1 // pred_check_branch
      %647 = sbr.rel (0) target = $region21
    $region20: #{_lambda_.6} parent=1 // pred_region
      _
    $region21: #{_lambda_.6} parent=1 // pred_fallthru
      _
    %648 = vsyncpa [#allocation3], 1

// kernel: _lambda_.8
$region0: #{_lambda_.8}
  #allocation0 [shape = 'u32[]', space=smem, size = 0x4, offset = 0x4, fixed_abs, tag = 'smem constant byte address 0x4 - core index']
  #allocation1 [shape = 'u32[72,128]{1,0:T(1,128)}', space=vmem, size = 0x9000, scoped, tag = 'internal scratch']
  %s0 = inlined_call_operand.vmem [shape: bf16[512,256], index: 0, kind: input, shape index: {}]
  %s1 = inlined_call_operand.vmem [shape: bf16[256,128], index: 1, kind: input, shape index: {}]
  %s2 = inlined_call_operand.vmem [shape: bf16[512,128], index: 2, kind: output, shape index: {}]
  %s3 = sld [smem:[#allocation0]]
  $region18: #{_lambda_.8} parent=0
    _
  %s5 = ssub.s32 1, %s3
  %s6 = scalar_select 0, %s5, %s3
  // Predicated region
  $region2: #{_lambda_.8} parent=0 // pred_check
    _
  $region3: #{_lambda_.8} parent=0 // pred_check_branch
    %8 = sbr.rel (0) target = $region5
  $region4: #{_lambda_.8} parent=0 // pred_region
    _
  $region5: #{_lambda_.8} parent=0 // pred_fallthru
    _
  // Predicated region
  $region6: #{_lambda_.8} parent=0 // pred_check
    _
  $region7: #{_lambda_.8} parent=0 // pred_check_branch
    %10 = sbr.rel (0) target = $region9
  $region8: #{_lambda_.8} parent=0 // pred_region
    _
  $region9: #{_lambda_.8} parent=0 // pred_fallthru
    _
  %v11 = vld [vmem:[%s0] sm:$0xff]
  %v12 = vld [vmem:[%s0 + $0x8] sm:$0xff]
  %v13 = vld [vmem:[%s0 + $0x10] sm:$0xff]
  %v14 = vld [vmem:[%s0 + $0x18] sm:$0xff]
  %v15 = vld [vmem:[%s0 + $0x20] sm:$0xff]
  %v16 = vld [vmem:[%s0 + $0x28] sm:$0xff]
  %v17 = vld [vmem:[%s0 + $0x30] sm:$0xff]
  %v18 = vld [vmem:[%s0 + $0x38] sm:$0xff]
  %v19 = vld [vmem:[%s0 + $0x40] sm:$0xff]
  %v20 = vld [vmem:[%s0 + $0x48] sm:$0xff]
  %v21 = vld [vmem:[%s0 + $0x50] sm:$0xff]
  %v22 = vld [vmem:[%s0 + $0x58] sm:$0xff]
  %v23 = vld [vmem:[%s0 + $0x60] sm:$0xff]
  %v24 = vld [vmem:[%s0 + $0x68] sm:$0xff]
  %v25 = vld [vmem:[%s0 + $0x70] sm:$0xff]
  %v26 = vld [vmem:[%s0 + $0x78] sm:$0xff]
  %v27 = vld [vmem:[%s0 + $0x80] sm:$0xff]
  %v28 = vld [vmem:[%s0 + $0x88] sm:$0xff]
  %v29 = vld [vmem:[%s0 + $0x90] sm:$0xff]
  %v30 = vld [vmem:[%s0 + $0x98] sm:$0xff]
  %v31 = vld [vmem:[%s0 + $0xa0] sm:$0xff]
  %v32 = vld [vmem:[%s0 + $0xa8] sm:$0xff]
  %v33 = vld [vmem:[%s0 + $0xb0] sm:$0xff]
  %v34 = vld [vmem:[%s0 + $0xb8] sm:$0xff]
  %v35 = vld [vmem:[%s0 + $0xc0] sm:$0xff]
  %v36 = vld [vmem:[%s0 + $0xc8] sm:$0xff]
  %v37 = vld [vmem:[%s0 + $0xd0] sm:$0xff]
  %v38 = vld [vmem:[%s0 + $0xd8] sm:$0xff]
  %v39 = vld [vmem:[%s0 + $0xe0] sm:$0xff]
  %v40 = vld [vmem:[%s0 + $0xe8] sm:$0xff]
  %v41 = vld [vmem:[%s0 + $0xf0] sm:$0xff]
  %v42 = vld [vmem:[%s0 + $0xf8] sm:$0xff]
  %v43 = vld [vmem:[%s0 + $0x100] sm:$0xff]
  %v44 = vld [vmem:[%s0 + $0x108] sm:$0xff]
  %v45 = vld [vmem:[%s0 + $0x110] sm:$0xff]
  %v46 = vld [vmem:[%s0 + $0x118] sm:$0xff]
  %v47 = vld [vmem:[%s0 + $0x120] sm:$0xff]
  %v48 = vld [vmem:[%s0 + $0x128] sm:$0xff]
  %v49 = vld [vmem:[%s0 + $0x130] sm:$0xff]
  %v50 = vld [vmem:[%s0 + $0x138] sm:$0xff]
  %v51 = vld [vmem:[%s0 + $0x140] sm:$0xff]
  %v52 = vld [vmem:[%s0 + $0x148] sm:$0xff]
  %v53 = vld [vmem:[%s0 + $0x150] sm:$0xff]
  %v54 = vld [vmem:[%s0 + $0x158] sm:$0xff]
  %v55 = vld [vmem:[%s0 + $0x160] sm:$0xff]
  %v56 = vld [vmem:[%s0 + $0x168] sm:$0xff]
  %v57 = vld [vmem:[%s0 + $0x170] sm:$0xff]
  %v58 = vld [vmem:[%s0 + $0x178] sm:$0xff]
  %v59 = vld [vmem:[%s0 + $0x180] sm:$0xff]
  %v60 = vld [vmem:[%s0 + $0x188] sm:$0xff]
  %v61 = vld [vmem:[%s0 + $0x190] sm:$0xff]
  %v62 = vld [vmem:[%s0 + $0x198] sm:$0xff]
  %v63 = vld [vmem:[%s0 + $0x1a0] sm:$0xff]
  %v64 = vld [vmem:[%s0 + $0x1a8] sm:$0xff]
  %v65 = vld [vmem:[%s0 + $0x1b0] sm:$0xff]
  %v66 = vld [vmem:[%s0 + $0x1b8] sm:$0xff]
  %v67 = vld [vmem:[%s0 + $0x1c0] sm:$0xff]
  %v68 = vld [vmem:[%s0 + $0x1c8] sm:$0xff]
  %v69 = vld [vmem:[%s0 + $0x1d0] sm:$0xff]
  %v70 = vld [vmem:[%s0 + $0x1d8] sm:$0xff]
  %v71 = vld [vmem:[%s0 + $0x1e0] sm:$0xff]
  %v72 = vld [vmem:[%s0 + $0x1e8] sm:$0xff]
  %v73 = vld [vmem:[%s0 + $0x1f0] sm:$0xff]
  %v74 = vld [vmem:[%s0 + $0x1f8] sm:$0xff]
  %v75 = vld [vmem:[%s1] sm:$0xf]
  %v76 = vld [vmem:[%s1 + $0x4] sm:$0xf]
  %v77 = vld [vmem:[%s1 + $0x8] sm:$0xf]
  %v78 = vld [vmem:[%s1 + $0xc] sm:$0xf]
  %v79 = vld [vmem:[%s1 + $0x10] sm:$0xf]
  %v80 = vld [vmem:[%s1 + $0x14] sm:$0xf]
  %v81 = vld [vmem:[%s1 + $0x18] sm:$0xf]
  %v82 = vld [vmem:[%s1 + $0x1c] sm:$0xf]
  %v83 = vld [vmem:[%s1 + $0x20] sm:$0xf]
  %v84 = vld [vmem:[%s1 + $0x24] sm:$0xf]
  %v85 = vld [vmem:[%s1 + $0x28] sm:$0xf]
  %v86 = vld [vmem:[%s1 + $0x2c] sm:$0xf]
  %v87 = vld [vmem:[%s1 + $0x30] sm:$0xf]
  %v88 = vld [vmem:[%s1 + $0x34] sm:$0xf]
  %v89 = vld [vmem:[%s1 + $0x38] sm:$0xf]
  %v90 = vld [vmem:[%s1 + $0x3c] sm:$0xf]
  %v91 = vld [vmem:[%s1 + $0x40] sm:$0xf]
  %v92 = vld [vmem:[%s1 + $0x44] sm:$0xf]
  %v93 = vld [vmem:[%s1 + $0x48] sm:$0xf]
  %v94 = vld [vmem:[%s1 + $0x4c] sm:$0xf]
  %v95 = vld [vmem:[%s1 + $0x50] sm:$0xf]
  %v96 = vld [vmem:[%s1 + $0x54] sm:$0xf]
  %v97 = vld [vmem:[%s1 + $0x58] sm:$0xf]
  %v98 = vld [vmem:[%s1 + $0x5c] sm:$0xf]
  %v99 = vld [vmem:[%s1 + $0x60] sm:$0xf]
  %v100 = vld [vmem:[%s1 + $0x64] sm:$0xf]
  %v101 = vld [vmem:[%s1 + $0x68] sm:$0xf]
  %v102 = vld [vmem:[%s1 + $0x6c] sm:$0xf]
  %v103 = vld [vmem:[%s1 + $0x70] sm:$0xf]
  %v104 = vld [vmem:[%s1 + $0x74] sm:$0xf]
  %v105 = vld [vmem:[%s1 + $0x78] sm:$0xf]
  %v106 = vld [vmem:[%s1 + $0x7c] sm:$0xf]
  %v171 = vunpack.c.l.b16 %v11
  %v172 = vunpack.c.h.b16 %v11
  %v173 = vunpack.c.l.b16 %v12
  %v174 = vunpack.c.h.b16 %v12
  %v175 = vunpack.c.l.b16 %v13
  %v176 = vunpack.c.h.b16 %v13
  %v177 = vunpack.c.l.b16 %v14
  %v178 = vunpack.c.h.b16 %v14
  %v179 = vunpack.c.l.b16 %v15
  %v180 = vunpack.c.h.b16 %v15
  %v181 = vunpack.c.l.b16 %v16
  %v182 = vunpack.c.h.b16 %v16
  %v183 = vunpack.c.l.b16 %v17
  %v184 = vunpack.c.h.b16 %v17
  %v185 = vunpack.c.l.b16 %v18
  %v186 = vunpack.c.h.b16 %v18
  %v187 = vunpack.c.l.b16 %v19
  %v188 = vunpack.c.h.b16 %v19
  %v189 = vunpack.c.l.b16 %v20
  %v190 = vunpack.c.h.b16 %v20
  %v191 = vunpack.c.l.b16 %v21
  %v192 = vunpack.c.h.b16 %v21
  %v193 = vunpack.c.l.b16 %v22
  %v194 = vunpack.c.h.b16 %v22
  %v195 = vunpack.c.l.b16 %v23
  %v196 = vunpack.c.h.b16 %v23
  %v197 = vunpack.c.l.b16 %v24
  %v198 = vunpack.c.h.b16 %v24
  %v199 = vunpack.c.l.b16 %v25
  %v200 = vunpack.c.h.b16 %v25
  %v201 = vunpack.c.l.b16 %v26
  %v202 = vunpack.c.h.b16 %v26
  %v203 = vunpack.c.l.b16 %v27
  %v204 = vunpack.c.h.b16 %v27
  %v205 = vunpack.c.l.b16 %v28
  %v206 = vunpack.c.h.b16 %v28
  %v207 = vunpack.c.l.b16 %v29
  %v208 = vunpack.c.h.b16 %v29
  %v209 = vunpack.c.l.b16 %v30
  %v210 = vunpack.c.h.b16 %v30
  %v211 = vunpack.c.l.b16 %v31
  %v212 = vunpack.c.h.b16 %v31
  %v213 = vunpack.c.l.b16 %v32
  %v214 = vunpack.c.h.b16 %v32
  %v215 = vunpack.c.l.b16 %v33
  %v216 = vunpack.c.h.b16 %v33
  %v217 = vunpack.c.l.b16 %v34
  %v218 = vunpack.c.h.b16 %v34
  %v219 = vunpack.c.l.b16 %v35
  %v220 = vunpack.c.h.b16 %v35
  %v221 = vunpack.c.l.b16 %v36
  %v222 = vunpack.c.h.b16 %v36
  %v223 = vunpack.c.l.b16 %v37
  %v224 = vunpack.c.h.b16 %v37
  %v225 = vunpack.c.l.b16 %v38
  %v226 = vunpack.c.h.b16 %v38
  %v227 = vunpack.c.l.b16 %v39
  %v228 = vunpack.c.h.b16 %v39
  %v229 = vunpack.c.l.b16 %v40
  %v230 = vunpack.c.h.b16 %v40
  %v231 = vunpack.c.l.b16 %v41
  %v232 = vunpack.c.h.b16 %v41
  %v233 = vunpack.c.l.b16 %v42
  %v234 = vunpack.c.h.b16 %v42
  %v235 = vunpack.c.l.b16 %v43
  %v236 = vunpack.c.h.b16 %v43
  %v237 = vunpack.c.l.b16 %v44
  %v238 = vunpack.c.h.b16 %v44
  %v239 = vunpack.c.l.b16 %v45
  %v240 = vunpack.c.h.b16 %v45
  %v241 = vunpack.c.l.b16 %v46
  %v242 = vunpack.c.h.b16 %v46
  %v243 = vunpack.c.l.b16 %v47
  %v244 = vunpack.c.h.b16 %v47
  %v245 = vunpack.c.l.b16 %v48
  %v246 = vunpack.c.h.b16 %v48
  %v247 = vunpack.c.l.b16 %v49
  %v248 = vunpack.c.h.b16 %v49
  %v249 = vunpack.c.l.b16 %v50
  %v250 = vunpack.c.h.b16 %v50
  %v251 = vunpack.c.l.b16 %v51
  %v252 = vunpack.c.h.b16 %v51
  %v253 = vunpack.c.l.b16 %v52
  %v254 = vunpack.c.h.b16 %v52
  %v255 = vunpack.c.l.b16 %v53
  %v256 = vunpack.c.h.b16 %v53
  %v257 = vunpack.c.l.b16 %v54
  %v258 = vunpack.c.h.b16 %v54
  %v259 = vunpack.c.l.b16 %v55
  %v260 = vunpack.c.h.b16 %v55
  %v261 = vunpack.c.l.b16 %v56
  %v262 = vunpack.c.h.b16 %v56
  %v263 = vunpack.c.l.b16 %v57
  %v264 = vunpack.c.h.b16 %v57
  %v265 = vunpack.c.l.b16 %v58
  %v266 = vunpack.c.h.b16 %v58
  %v267 = vunpack.c.l.b16 %v59
  %v268 = vunpack.c.h.b16 %v59
  %v269 = vunpack.c.l.b16 %v60
  %v270 = vunpack.c.h.b16 %v60
  %v271 = vunpack.c.l.b16 %v61
  %v272 = vunpack.c.h.b16 %v61
  %v273 = vunpack.c.l.b16 %v62
  %v274 = vunpack.c.h.b16 %v62
  %v275 = vunpack.c.l.b16 %v63
  %v276 = vunpack.c.h.b16 %v63
  %v277 = vunpack.c.l.b16 %v64
  %v278 = vunpack.c.h.b16 %v64
  %v279 = vunpack.c.l.b16 %v65
  %v280 = vunpack.c.h.b16 %v65
  %v281 = vunpack.c.l.b16 %v66
  %v282 = vunpack.c.h.b16 %v66
  %v283 = vunpack.c.l.b16 %v67
  %v284 = vunpack.c.h.b16 %v67
  %v285 = vunpack.c.l.b16 %v68
  %v286 = vunpack.c.h.b16 %v68
  %v287 = vunpack.c.l.b16 %v69
  %v288 = vunpack.c.h.b16 %v69
  %v289 = vunpack.c.l.b16 %v70
  %v290 = vunpack.c.h.b16 %v70
  %v291 = vunpack.c.l.b16 %v71
  %v292 = vunpack.c.h.b16 %v71
  %v293 = vunpack.c.l.b16 %v72
  %v294 = vunpack.c.h.b16 %v72
  %v295 = vunpack.c.l.b16 %v73
  %v296 = vunpack.c.h.b16 %v73
  %v297 = vunpack.c.l.b16 %v74
  %v298 = vunpack.c.h.b16 %v74
  %v299 = vpack.c.b16 %v173, %v171
  %v300 = vpack.c.b16 %v174, %v172
  %v301 = vpack.c.b16 %v177, %v175
  %v302 = vpack.c.b16 %v178, %v176
  %v303 = vpack.c.b16 %v181, %v179
  %v304 = vpack.c.b16 %v182, %v180
  %v305 = vpack.c.b16 %v185, %v183
  %v306 = vpack.c.b16 %v186, %v184
  %v307 = vpack.c.b16 %v189, %v187
  %v308 = vpack.c.b16 %v190, %v188
  %v309 = vpack.c.b16 %v193, %v191
  %v310 = vpack.c.b16 %v194, %v192
  %v311 = vpack.c.b16 %v197, %v195
  %v312 = vpack.c.b16 %v198, %v196
  %v313 = vpack.c.b16 %v201, %v199
  %v314 = vpack.c.b16 %v202, %v200
  %v315 = vpack.c.b16 %v205, %v203
  %v316 = vpack.c.b16 %v206, %v204
  %v317 = vpack.c.b16 %v209, %v207
  %v318 = vpack.c.b16 %v210, %v208
  %v319 = vpack.c.b16 %v213, %v211
  %v320 = vpack.c.b16 %v214, %v212
  %v321 = vpack.c.b16 %v217, %v215
  %v322 = vpack.c.b16 %v218, %v216
  %v323 = vpack.c.b16 %v221, %v219
  %v324 = vpack.c.b16 %v222, %v220
  %v325 = vpack.c.b16 %v225, %v223
  %v326 = vpack.c.b16 %v226, %v224
  %v327 = vpack.c.b16 %v229, %v227
  %v328 = vpack.c.b16 %v230, %v228
  %v329 = vpack.c.b16 %v233, %v231
  %v330 = vpack.c.b16 %v234, %v232
  %v331 = vpack.c.b16 %v237, %v235
  %v332 = vpack.c.b16 %v238, %v236
  %v333 = vpack.c.b16 %v241, %v239
  %v334 = vpack.c.b16 %v242, %v240
  %v335 = vpack.c.b16 %v245, %v243
  %v336 = vpack.c.b16 %v246, %v244
  %v337 = vpack.c.b16 %v249, %v247
  %v338 = vpack.c.b16 %v250, %v248
  %v339 = vpack.c.b16 %v253, %v251
  %v340 = vpack.c.b16 %v254, %v252
  %v341 = vpack.c.b16 %v257, %v255
  %v342 = vpack.c.b16 %v258, %v256
  %v343 = vpack.c.b16 %v261, %v259
  %v344 = vpack.c.b16 %v262, %v260
  %v345 = vpack.c.b16 %v265, %v263
  %v346 = vpack.c.b16 %v266, %v264
  %v347 = vpack.c.b16 %v269, %v267
  %v348 = vpack.c.b16 %v270, %v268
  %v349 = vpack.c.b16 %v273, %v271
  %v350 = vpack.c.b16 %v274, %v272
  %v351 = vpack.c.b16 %v277, %v275
  %v352 = vpack.c.b16 %v278, %v276
  %v353 = vpack.c.b16 %v281, %v279
  %v354 = vpack.c.b16 %v282, %v280
  %v355 = vpack.c.b16 %v285, %v283
  %v356 = vpack.c.b16 %v286, %v284
  %v357 = vpack.c.b16 %v289, %v287
  %v358 = vpack.c.b16 %v290, %v288
  %v359 = vpack.c.b16 %v293, %v291
  %v360 = vpack.c.b16 %v294, %v292
  %v361 = vpack.c.b16 %v297, %v295
  %v362 = vpack.c.b16 %v298, %v296
  %v459 = vunpack.c.l.b16 %v75
  %v460 = vunpack.c.l.b16 %v76
  %v461 = vunpack.c.l.b16 %v77
  %v462 = vunpack.c.l.b16 %v78
  %v463 = vunpack.c.l.b16 %v79
  %v464 = vunpack.c.l.b16 %v80
  %v465 = vunpack.c.l.b16 %v81
  %v466 = vunpack.c.l.b16 %v82
  %v467 = vunpack.c.l.b16 %v83
  %v468 = vunpack.c.l.b16 %v84
  %v469 = vunpack.c.l.b16 %v85
  %v470 = vunpack.c.l.b16 %v86
  %v471 = vunpack.c.l.b16 %v87
  %v472 = vunpack.c.l.b16 %v88
  %v473 = vunpack.c.l.b16 %v89
  %v474 = vunpack.c.l.b16 %v90
  %v475 = vunpack.c.l.b16 %v91
  %v476 = vunpack.c.l.b16 %v92
  %v477 = vunpack.c.l.b16 %v93
  %v478 = vunpack.c.l.b16 %v94
  %v479 = vunpack.c.l.b16 %v95
  %v480 = vunpack.c.l.b16 %v96
  %v481 = vunpack.c.l.b16 %v97
  %v482 = vunpack.c.l.b16 %v98
  %v483 = vunpack.c.l.b16 %v99
  %v484 = vunpack.c.l.b16 %v100
  %v485 = vunpack.c.l.b16 %v101
  %v486 = vunpack.c.l.b16 %v102
  %v487 = vunpack.c.l.b16 %v103
  %v488 = vunpack.c.l.b16 %v104
  %v489 = vunpack.c.l.b16 %v105
  %v490 = vunpack.c.l.b16 %v106
  %v491 = vpack.c.b16 %v460, %v459
  %v492 = vpack.c.b16 %v462, %v461
  %v493 = vpack.c.b16 %v464, %v463
  %v494 = vpack.c.b16 %v466, %v465
  %v495 = vpack.c.b16 %v468, %v467
  %v496 = vpack.c.b16 %v470, %v469
  %v497 = vpack.c.b16 %v472, %v471
  %v498 = vpack.c.b16 %v474, %v473
  %v499 = vpack.c.b16 %v476, %v475
  %v500 = vpack.c.b16 %v478, %v477
  %v501 = vpack.c.b16 %v480, %v479
  %v502 = vpack.c.b16 %v482, %v481
  %v503 = vpack.c.b16 %v484, %v483
  %v504 = vpack.c.b16 %v486, %v485
  %v505 = vpack.c.b16 %v488, %v487
  %v506 = vpack.c.b16 %v490, %v489
  %523 = vmatpush.bf16.msra.mxu0 %v498
  %524 = vmatpush.bf16.msra.mxu0 %v497
  %525 = vmatpush.bf16.msra.mxu0 %v496
  %526 = vmatpush.bf16.msra.mxu0 %v495
  %527 = vmatpush.bf16.msra.mxu0 %v494
  %528 = vmatpush.bf16.msra.mxu0 %v493
  %529 = vmatpush.bf16.msra.mxu0 %v492
  %530 = vmatpush.bf16.msra.mxu0 %v491
  %531 = vmatmul.bf16.gmra.mxu0 %v299
  %v532 = vpop.f32.mrf.mxu0
  %v533 = vadd.f32 0.0, %v532
  %v534 = vpop.f32.mrf.mxu0
  %v535 = vadd.f32 0.0, %v534
  %536 = vmatmul.bf16.gmra.mxu0 %v301
  %v537 = vpop.f32.mrf.mxu0
  %v538 = vadd.f32 0.0, %v537
  %v539 = vpop.f32.mrf.mxu0
  %v540 = vadd.f32 0.0, %v539
  %541 = vmatmul.bf16.gmra.mxu0 %v303
  %v542 = vpop.f32.mrf.mxu0
  %v543 = vadd.f32 0.0, %v542
  %v544 = vpop.f32.mrf.mxu0
  %v545 = vadd.f32 0.0, %v544
  %546 = vmatmul.bf16.gmra.mxu0 %v305
  %v547 = vpop.f32.mrf.mxu0
  %v548 = vadd.f32 0.0, %v547
  %v549 = vpop.f32.mrf.mxu0
  %v550 = vadd.f32 0.0, %v549
  %551 = vmatmul.bf16.gmra.mxu0 %v307
  %v552 = vpop.f32.mrf.mxu0
  %v553 = vadd.f32 0.0, %v552
  %v554 = vpop.f32.mrf.mxu0
  %v555 = vadd.f32 0.0, %v554
  %556 = vmatmul.bf16.gmra.mxu0 %v309
  %v557 = vpop.f32.mrf.mxu0
  %v558 = vadd.f32 0.0, %v557
  %v559 = vpop.f32.mrf.mxu0
  %v560 = vadd.f32 0.0, %v559
  %561 = vmatmul.bf16.gmra.mxu0 %v311
  %v562 = vpop.f32.mrf.mxu0
  %v563 = vadd.f32 0.0, %v562
  %v564 = vpop.f32.mrf.mxu0
  %v565 = vadd.f32 0.0, %v564
  %566 = vmatmul.bf16.gmra.mxu0 %v313
  %v567 = vpop.f32.mrf.mxu0
  %v568 = vadd.f32 0.0, %v567
  %v569 = vpop.f32.mrf.mxu0
  %v570 = vadd.f32 0.0, %v569
  %571 = vmatmul.bf16.gmra.mxu0 %v315
  %v572 = vpop.f32.mrf.mxu0
  %v573 = vadd.f32 0.0, %v572
  %v574 = vpop.f32.mrf.mxu0
  %v575 = vadd.f32 0.0, %v574
  %576 = vmatmul.bf16.gmra.mxu0 %v317
  %v577 = vpop.f32.mrf.mxu0
  %v578 = vadd.f32 0.0, %v577
  %v579 = vpop.f32.mrf.mxu0
  %v580 = vadd.f32 0.0, %v579
  %581 = vmatmul.bf16.gmra.mxu0 %v319
  %v582 = vpop.f32.mrf.mxu0
  %v583 = vadd.f32 0.0, %v582
  %v584 = vpop.f32.mrf.mxu0
  %v585 = vadd.f32 0.0, %v584
  %586 = vmatmul.bf16.gmra.mxu0 %v321
  %v587 = vpop.f32.mrf.mxu0
  %v588 = vadd.f32 0.0, %v587
  %v589 = vpop.f32.mrf.mxu0
  %v590 = vadd.f32 0.0, %v589
  %591 = vmatmul.bf16.gmra.mxu0 %v323
  %v592 = vpop.f32.mrf.mxu0
  %v593 = vadd.f32 0.0, %v592
  %v594 = vpop.f32.mrf.mxu0
  %v595 = vadd.f32 0.0, %v594
  %596 = vmatmul.bf16.gmra.mxu0 %v325
  %v597 = vpop.f32.mrf.mxu0
  %v598 = vadd.f32 0.0, %v597
  %v599 = vpop.f32.mrf.mxu0
  %v600 = vadd.f32 0.0, %v599
  %601 = vmatmul.bf16.gmra.mxu0 %v327
  %v602 = vpop.f32.mrf.mxu0
  %v603 = vadd.f32 0.0, %v602
  %v604 = vpop.f32.mrf.mxu0
  %v605 = vadd.f32 0.0, %v604
  %606 = vmatmul.bf16.gmra.mxu0 %v329
  %v607 = vpop.f32.mrf.mxu0
  %v608 = vadd.f32 0.0, %v607
  %v609 = vpop.f32.mrf.mxu0
  %v610 = vadd.f32 0.0, %v609
  %611 = vmatmul.bf16.gmra.mxu0 %v331
  %v612 = vpop.f32.mrf.mxu0
  %v613 = vadd.f32 0.0, %v612
  %v614 = vpop.f32.mrf.mxu0
  %v615 = vadd.f32 0.0, %v614
  %616 = vmatmul.bf16.gmra.mxu0 %v333
  %v617 = vpop.f32.mrf.mxu0
  %v618 = vadd.f32 0.0, %v617
  %v619 = vpop.f32.mrf.mxu0
  %v620 = vadd.f32 0.0, %v619
  %621 = vmatmul.bf16.gmra.mxu0 %v335
  %v622 = vpop.f32.mrf.mxu0
  %v623 = vadd.f32 0.0, %v622
  %v624 = vpop.f32.mrf.mxu0
  %v625 = vadd.f32 0.0, %v624
  %626 = vmatmul.bf16.gmra.mxu0 %v337
  %v627 = vpop.f32.mrf.mxu0
  %v628 = vadd.f32 0.0, %v627
  %v629 = vpop.f32.mrf.mxu0
  %v630 = vadd.f32 0.0, %v629
  %631 = vmatmul.bf16.gmra.mxu0 %v339
  %v632 = vpop.f32.mrf.mxu0
  %v633 = vadd.f32 0.0, %v632
  %v634 = vpop.f32.mrf.mxu0
  %v635 = vadd.f32 0.0, %v634
  %636 = vmatmul.bf16.gmra.mxu0 %v341
  %v637 = vpop.f32.mrf.mxu0
  %v638 = vadd.f32 0.0, %v637
  %v639 = vpop.f32.mrf.mxu0
  %v640 = vadd.f32 0.0, %v639
  %641 = vmatmul.bf16.gmra.mxu0 %v343
  %v642 = vpop.f32.mrf.mxu0
  %v643 = vadd.f32 0.0, %v642
  %v644 = vpop.f32.mrf.mxu0
  %v645 = vadd.f32 0.0, %v644
  %646 = vmatmul.bf16.gmra.mxu0 %v345
  %v647 = vpop.f32.mrf.mxu0
  %v648 = vadd.f32 0.0, %v647
  %v649 = vpop.f32.mrf.mxu0
  %v650 = vadd.f32 0.0, %v649
  %651 = vmatmul.bf16.gmra.mxu0 %v347
  %v652 = vpop.f32.mrf.mxu0
  %v653 = vadd.f32 0.0, %v652
  %v654 = vpop.f32.mrf.mxu0
  %v655 = vadd.f32 0.0, %v654
  %656 = vmatmul.bf16.gmra.mxu0 %v349
  %v657 = vpop.f32.mrf.mxu0
  %v658 = vadd.f32 0.0, %v657
  %v659 = vpop.f32.mrf.mxu0
  %v660 = vadd.f32 0.0, %v659
  %661 = vmatmul.bf16.gmra.mxu0 %v351
  %v662 = vpop.f32.mrf.mxu0
  %v663 = vadd.f32 0.0, %v662
  %v664 = vpop.f32.mrf.mxu0
  %v665 = vadd.f32 0.0, %v664
  %666 = vmatmul.bf16.gmra.mxu0 %v353
  %v667 = vpop.f32.mrf.mxu0
  %v668 = vadd.f32 0.0, %v667
  %v669 = vpop.f32.mrf.mxu0
  %v670 = vadd.f32 0.0, %v669
  %671 = vmatmul.bf16.gmra.mxu0 %v355
  %v672 = vpop.f32.mrf.mxu0
  %v673 = vadd.f32 0.0, %v672
  %v674 = vpop.f32.mrf.mxu0
  %v675 = vadd.f32 0.0, %v674
  %676 = vmatmul.bf16.gmra.mxu0 %v357
  %v677 = vpop.f32.mrf.mxu0
  %v678 = vadd.f32 0.0, %v677
  %v679 = vpop.f32.mrf.mxu0
  %v680 = vadd.f32 0.0, %v679
  %681 = vmatmul.bf16.gmra.mxu0 %v359
  %v682 = vpop.f32.mrf.mxu0
  %v683 = vadd.f32 0.0, %v682
  %v684 = vpop.f32.mrf.mxu0
  %v685 = vadd.f32 0.0, %v684
  %686 = vmatmul.bf16.gmra.mxu0 %v361
  %v687 = vpop.f32.mrf.mxu0
  %v688 = vadd.f32 0.0, %v687
  %v689 = vpop.f32.mrf.mxu0
  %v690 = vadd.f32 0.0, %v689
  %691 = vdwg.mxu0
  %692 = vmatpush.bf16.msra.mxu0 %v506
  %693 = vmatpush.bf16.msra.mxu0 %v505
  %694 = vmatpush.bf16.msra.mxu0 %v504
  %695 = vmatpush.bf16.msra.mxu0 %v503
  %696 = vmatpush.bf16.msra.mxu0 %v502
  %697 = vmatpush.bf16.msra.mxu0 %v501
  %698 = vmatpush.bf16.msra.mxu0 %v500
  %699 = vmatpush.bf16.msra.mxu0 %v499
  %700 = vmatmul.bf16.gmra.mxu0 %v300
  %v701 = vpop.f32.mrf.mxu0
  %v702 = vadd.f32 %v533, %v701
  %v703 = vpop.f32.mrf.mxu0
  %v704 = vadd.f32 %v535, %v703
  %705 = vmatmul.bf16.gmra.mxu0 %v302
  %v706 = vpop.f32.mrf.mxu0
  %v707 = vadd.f32 %v538, %v706
  %v708 = vpop.f32.mrf.mxu0
  %v709 = vadd.f32 %v540, %v708
  %710 = vmatmul.bf16.gmra.mxu0 %v304
  %v711 = vpop.f32.mrf.mxu0
  %v712 = vadd.f32 %v543, %v711
  %v713 = vpop.f32.mrf.mxu0
  %v714 = vadd.f32 %v545, %v713
  %715 = vmatmul.bf16.gmra.mxu0 %v306
  %v716 = vpop.f32.mrf.mxu0
  %v717 = vadd.f32 %v548, %v716
  %v718 = vpop.f32.mrf.mxu0
  %v719 = vadd.f32 %v550, %v718
  %720 = vmatmul.bf16.gmra.mxu0 %v308
  %v721 = vpop.f32.mrf.mxu0
  %v722 = vadd.f32 %v553, %v721
  %v723 = vpop.f32.mrf.mxu0
  %v724 = vadd.f32 %v555, %v723
  %725 = vmatmul.bf16.gmra.mxu0 %v310
  %v726 = vpop.f32.mrf.mxu0
  %v727 = vadd.f32 %v558, %v726
  %v728 = vpop.f32.mrf.mxu0
  %v729 = vadd.f32 %v560, %v728
  %730 = vmatmul.bf16.gmra.mxu0 %v312
  %v731 = vpop.f32.mrf.mxu0
  %v732 = vadd.f32 %v563, %v731
  %v733 = vpop.f32.mrf.mxu0
  %v734 = vadd.f32 %v565, %v733
  %735 = vmatmul.bf16.gmra.mxu0 %v314
  %v736 = vpop.f32.mrf.mxu0
  %v737 = vadd.f32 %v568, %v736
  %v738 = vpop.f32.mrf.mxu0
  %v739 = vadd.f32 %v570, %v738
  %740 = vmatmul.bf16.gmra.mxu0 %v316
  %v741 = vpop.f32.mrf.mxu0
  %v742 = vadd.f32 %v573, %v741
  %v743 = vpop.f32.mrf.mxu0
  %v744 = vadd.f32 %v575, %v743
  %745 = vmatmul.bf16.gmra.mxu0 %v318
  %v746 = vpop.f32.mrf.mxu0
  %v747 = vadd.f32 %v578, %v746
  %v748 = vpop.f32.mrf.mxu0
  %v749 = vadd.f32 %v580, %v748
  %750 = vmatmul.bf16.gmra.mxu0 %v320
  %v751 = vpop.f32.mrf.mxu0
  %v752 = vadd.f32 %v583, %v751
  %v753 = vpop.f32.mrf.mxu0
  %v754 = vadd.f32 %v585, %v753
  %755 = vmatmul.bf16.gmra.mxu0 %v322
  %v756 = vpop.f32.mrf.mxu0
  %v757 = vadd.f32 %v588, %v756
  %v758 = vpop.f32.mrf.mxu0
  %v759 = vadd.f32 %v590, %v758
  %760 = vmatmul.bf16.gmra.mxu0 %v324
  %v761 = vpop.f32.mrf.mxu0
  %v762 = vadd.f32 %v593, %v761
  %v763 = vpop.f32.mrf.mxu0
  %v764 = vadd.f32 %v595, %v763
  %765 = vmatmul.bf16.gmra.mxu0 %v326
  %v766 = vpop.f32.mrf.mxu0
  %v767 = vadd.f32 %v598, %v766
  %v768 = vpop.f32.mrf.mxu0
  %v769 = vadd.f32 %v600, %v768
  %770 = vmatmul.bf16.gmra.mxu0 %v328
  %v771 = vpop.f32.mrf.mxu0
  %v772 = vadd.f32 %v603, %v771
  %v773 = vpop.f32.mrf.mxu0
  %v774 = vadd.f32 %v605, %v773
  %775 = vmatmul.bf16.gmra.mxu0 %v330
  %v776 = vpop.f32.mrf.mxu0
  %v777 = vadd.f32 %v608, %v776
  %v778 = vpop.f32.mrf.mxu0
  %v779 = vadd.f32 %v610, %v778
  %780 = vmatmul.bf16.gmra.mxu0 %v332
  %v781 = vpop.f32.mrf.mxu0
  %v782 = vadd.f32 %v613, %v781
  %v783 = vpop.f32.mrf.mxu0
  %v784 = vadd.f32 %v615, %v783
  %785 = vmatmul.bf16.gmra.mxu0 %v334
  %v786 = vpop.f32.mrf.mxu0
  %v787 = vadd.f32 %v618, %v786
  %v788 = vpop.f32.mrf.mxu0
  %v789 = vadd.f32 %v620, %v788
  %790 = vmatmul.bf16.gmra.mxu0 %v336
  %v791 = vpop.f32.mrf.mxu0
  %v792 = vadd.f32 %v623, %v791
  %v793 = vpop.f32.mrf.mxu0
  %v794 = vadd.f32 %v625, %v793
  %795 = vmatmul.bf16.gmra.mxu0 %v338
  %v796 = vpop.f32.mrf.mxu0
  %v797 = vadd.f32 %v628, %v796
  %v798 = vpop.f32.mrf.mxu0
  %v799 = vadd.f32 %v630, %v798
  %800 = vmatmul.bf16.gmra.mxu0 %v340
  %v801 = vpop.f32.mrf.mxu0
  %v802 = vadd.f32 %v633, %v801
  %v803 = vpop.f32.mrf.mxu0
  %v804 = vadd.f32 %v635, %v803
  %805 = vmatmul.bf16.gmra.mxu0 %v342
  %v806 = vpop.f32.mrf.mxu0
  %v807 = vadd.f32 %v638, %v806
  %v808 = vpop.f32.mrf.mxu0
  %v809 = vadd.f32 %v640, %v808
  %810 = vmatmul.bf16.gmra.mxu0 %v344
  %v811 = vpop.f32.mrf.mxu0
  %v812 = vadd.f32 %v643, %v811
  %v813 = vpop.f32.mrf.mxu0
  %v814 = vadd.f32 %v645, %v813
  %815 = vmatmul.bf16.gmra.mxu0 %v346
  %v816 = vpop.f32.mrf.mxu0
  %v817 = vadd.f32 %v648, %v816
  %v818 = vpop.f32.mrf.mxu0
  %v819 = vadd.f32 %v650, %v818
  %820 = vmatmul.bf16.gmra.mxu0 %v348
  %v821 = vpop.f32.mrf.mxu0
  %v822 = vadd.f32 %v653, %v821
  %v823 = vpop.f32.mrf.mxu0
  %v824 = vadd.f32 %v655, %v823
  %825 = vmatmul.bf16.gmra.mxu0 %v350
  %v826 = vpop.f32.mrf.mxu0
  %v827 = vadd.f32 %v658, %v826
  %v828 = vpop.f32.mrf.mxu0
  %v829 = vadd.f32 %v660, %v828
  %830 = vmatmul.bf16.gmra.mxu0 %v352
  %v831 = vpop.f32.mrf.mxu0
  %v832 = vadd.f32 %v663, %v831
  %v833 = vpop.f32.mrf.mxu0
  %v834 = vadd.f32 %v665, %v833
  %835 = vmatmul.bf16.gmra.mxu0 %v354
  %v836 = vpop.f32.mrf.mxu0
  %v837 = vadd.f32 %v668, %v836
  %v838 = vpop.f32.mrf.mxu0
  %v839 = vadd.f32 %v670, %v838
  %840 = vmatmul.bf16.gmra.mxu0 %v356
  %v841 = vpop.f32.mrf.mxu0
  %v842 = vadd.f32 %v673, %v841
  %v843 = vpop.f32.mrf.mxu0
  %v844 = vadd.f32 %v675, %v843
  %845 = vmatmul.bf16.gmra.mxu0 %v358
  %v846 = vpop.f32.mrf.mxu0
  %v847 = vadd.f32 %v678, %v846
  %v848 = vpop.f32.mrf.mxu0
  %v849 = vadd.f32 %v680, %v848
  %850 = vmatmul.bf16.gmra.mxu0 %v360
  %v851 = vpop.f32.mrf.mxu0
  %v852 = vadd.f32 %v683, %v851
  %v853 = vpop.f32.mrf.mxu0
  %v854 = vadd.f32 %v685, %v853
  %855 = vmatmul.bf16.gmra.mxu0 %v362
  %v856 = vpop.f32.mrf.mxu0
  %v857 = vadd.f32 %v688, %v856
  %v858 = vpop.f32.mrf.mxu0
  %v859 = vadd.f32 %v690, %v858
  %860 = vdwg.mxu0
  %v861 = vpack.c.bf16 %v702, %v702
  %v862 = vpack.c.bf16 %v704, %v704
  %v863 = vpack.c.bf16 %v707, %v707
  %v864 = vpack.c.bf16 %v709, %v709
  %v865 = vpack.c.bf16 %v712, %v712
  %v866 = vpack.c.bf16 %v714, %v714
  %v867 = vpack.c.bf16 %v717, %v717
  %v868 = vpack.c.bf16 %v719, %v719
  %v869 = vpack.c.bf16 %v722, %v722
  %v870 = vpack.c.bf16 %v724, %v724
  %v871 = vpack.c.bf16 %v727, %v727
  %v872 = vpack.c.bf16 %v729, %v729
  %v873 = vpack.c.bf16 %v732, %v732
  %v874 = vpack.c.bf16 %v734, %v734
  %v875 = vpack.c.bf16 %v737, %v737
  %v876 = vpack.c.bf16 %v739, %v739
  %v877 = vpack.c.bf16 %v742, %v742
  %v878 = vpack.c.bf16 %v744, %v744
  %v879 = vpack.c.bf16 %v747, %v747
  %v880 = vpack.c.bf16 %v749, %v749
  %v881 = vpack.c.bf16 %v752, %v752
  %v882 = vpack.c.bf16 %v754, %v754
  %v883 = vpack.c.bf16 %v757, %v757
  %v884 = vpack.c.bf16 %v759, %v759
  %v885 = vpack.c.bf16 %v762, %v762
  %v886 = vpack.c.bf16 %v764, %v764
  %v887 = vpack.c.bf16 %v767, %v767
  %v888 = vpack.c.bf16 %v769, %v769
  %v889 = vpack.c.bf16 %v772, %v772
  %v890 = vpack.c.bf16 %v774, %v774
  %v891 = vpack.c.bf16 %v777, %v777
  %v892 = vpack.c.bf16 %v779, %v779
  %v893 = vpack.c.bf16 %v782, %v782
  %v894 = vpack.c.bf16 %v784, %v784
  %v895 = vpack.c.bf16 %v787, %v787
  %v896 = vpack.c.bf16 %v789, %v789
  %v897 = vpack.c.bf16 %v792, %v792
  %v898 = vpack.c.bf16 %v794, %v794
  %v899 = vpack.c.bf16 %v797, %v797
  %v900 = vpack.c.bf16 %v799, %v799
  %v901 = vpack.c.bf16 %v802, %v802
  %v902 = vpack.c.bf16 %v804, %v804
  %v903 = vpack.c.bf16 %v807, %v807
  %v904 = vpack.c.bf16 %v809, %v809
  %v905 = vpack.c.bf16 %v812, %v812
  %v906 = vpack.c.bf16 %v814, %v814
  %v907 = vpack.c.bf16 %v817, %v817
  %v908 = vpack.c.bf16 %v819, %v819
  %v909 = vpack.c.bf16 %v822, %v822
  %v910 = vpack.c.bf16 %v824, %v824
  %v911 = vpack.c.bf16 %v827, %v827
  %v912 = vpack.c.bf16 %v829, %v829
  %v913 = vpack.c.bf16 %v832, %v832
  %v914 = vpack.c.bf16 %v834, %v834
  %v915 = vpack.c.bf16 %v837, %v837
  %v916 = vpack.c.bf16 %v839, %v839
  %v917 = vpack.c.bf16 %v842, %v842
  %v918 = vpack.c.bf16 %v844, %v844
  %v919 = vpack.c.bf16 %v847, %v847
  %v920 = vpack.c.bf16 %v849, %v849
  %v921 = vpack.c.bf16 %v852, %v852
  %v922 = vpack.c.bf16 %v854, %v854
  %v923 = vpack.c.bf16 %v857, %v857
  %v924 = vpack.c.bf16 %v859, %v859
  %925 = vst [vmem:[%s2] sm:$0xf] %v861
  %926 = vst [vmem:[%s2 + $0x4] sm:$0xf] %v862
  %927 = vst [vmem:[%s2 + $0x8] sm:$0xf] %v863
  %928 = vst [vmem:[%s2 + $0xc] sm:$0xf] %v864
  %929 = vst [vmem:[%s2 + $0x10] sm:$0xf] %v865
  %930 = vst [vmem:[%s2 + $0x14] sm:$0xf] %v866
  %931 = vst [vmem:[%s2 + $0x18] sm:$0xf] %v867
  %932 = vst [vmem:[%s2 + $0x1c] sm:$0xf] %v868
  %933 = vst [vmem:[%s2 + $0x20] sm:$0xf] %v869
  %934 = vst [vmem:[%s2 + $0x24] sm:$0xf] %v870
  %935 = vst [vmem:[%s2 + $0x28] sm:$0xf] %v871
  %936 = vst [vmem:[%s2 + $0x2c] sm:$0xf] %v872
  %937 = vst [vmem:[%s2 + $0x30] sm:$0xf] %v873
  %938 = vst [vmem:[%s2 + $0x34] sm:$0xf] %v874
  %939 = vst [vmem:[%s2 + $0x38] sm:$0xf] %v875
  %940 = vst [vmem:[%s2 + $0x3c] sm:$0xf] %v876
  %941 = vst [vmem:[%s2 + $0x40] sm:$0xf] %v877
  %942 = vst [vmem:[%s2 + $0x44] sm:$0xf] %v878
  %943 = vst [vmem:[%s2 + $0x48] sm:$0xf] %v879
  %944 = vst [vmem:[%s2 + $0x4c] sm:$0xf] %v880
  %945 = vst [vmem:[%s2 + $0x50] sm:$0xf] %v881
  %946 = vst [vmem:[%s2 + $0x54] sm:$0xf] %v882
  %947 = vst [vmem:[%s2 + $0x58] sm:$0xf] %v883
  %948 = vst [vmem:[%s2 + $0x5c] sm:$0xf] %v884
  %949 = vst [vmem:[%s2 + $0x60] sm:$0xf] %v885
  %950 = vst [vmem:[%s2 + $0x64] sm:$0xf] %v886
  %951 = vst [vmem:[%s2 + $0x68] sm:$0xf] %v887
  %952 = vst [vmem:[%s2 + $0x6c] sm:$0xf] %v888
  %953 = vst [vmem:[%s2 + $0x70] sm:$0xf] %v889
  %954 = vst [vmem:[%s2 + $0x74] sm:$0xf] %v890
  %955 = vst [vmem:[%s2 + $0x78] sm:$0xf] %v891
  %956 = vst [vmem:[%s2 + $0x7c] sm:$0xf] %v892
  %957 = vst [vmem:[%s2 + $0x80] sm:$0xf] %v893
  %958 = vst [vmem:[%s2 + $0x84] sm:$0xf] %v894
  %959 = vst [vmem:[%s2 + $0x88] sm:$0xf] %v895
  %960 = vst [vmem:[%s2 + $0x8c] sm:$0xf] %v896
  %961 = vst [vmem:[%s2 + $0x90] sm:$0xf] %v897
  %962 = vst [vmem:[%s2 + $0x94] sm:$0xf] %v898
  %963 = vst [vmem:[%s2 + $0x98] sm:$0xf] %v899
  %964 = vst [vmem:[%s2 + $0x9c] sm:$0xf] %v900
  %965 = vst [vmem:[%s2 + $0xa0] sm:$0xf] %v901
  %966 = vst [vmem:[%s2 + $0xa4] sm:$0xf] %v902
  %967 = vst [vmem:[%s2 + $0xa8] sm:$0xf] %v903
  %968 = vst [vmem:[%s2 + $0xac] sm:$0xf] %v904
  %969 = vst [vmem:[%s2 + $0xb0] sm:$0xf] %v905
  %970 = vst [vmem:[%s2 + $0xb4] sm:$0xf] %v906
  %971 = vst [vmem:[%s2 + $0xb8] sm:$0xf] %v907
  %972 = vst [vmem:[%s2 + $0xbc] sm:$0xf] %v908
  %973 = vst [vmem:[%s2 + $0xc0] sm:$0xf] %v909
  %974 = vst [vmem:[%s2 + $0xc4] sm:$0xf] %v910
  %975 = vst [vmem:[%s2 + $0xc8] sm:$0xf] %v911
  %976 = vst [vmem:[%s2 + $0xcc] sm:$0xf] %v912
  %977 = vst [vmem:[%s2 + $0xd0] sm:$0xf] %v913
  %978 = vst [vmem:[%s2 + $0xd4] sm:$0xf] %v914
  %979 = vst [vmem:[%s2 + $0xd8] sm:$0xf] %v915
  %980 = vst [vmem:[%s2 + $0xdc] sm:$0xf] %v916
  %981 = vst [vmem:[%s2 + $0xe0] sm:$0xf] %v917
  %982 = vst [vmem:[%s2 + $0xe4] sm:$0xf] %v918
  %983 = vst [vmem:[%s2 + $0xe8] sm:$0xf] %v919
  %984 = vst [vmem:[%s2 + $0xec] sm:$0xf] %v920
  %985 = vst [vmem:[%s2 + $0xf0] sm:$0xf] %v921
  %986 = vst [vmem:[%s2 + $0xf4] sm:$0xf] %v922
  %987 = vst [vmem:[%s2 + $0xf8] sm:$0xf] %v923
  %988 = vst [vmem:[%s2 + $0xfc] sm:$0xf] %v924
  // Predicated region
  $region10: #{_lambda_.8} parent=0 // pred_check
    _
  $region11: #{_lambda_.8} parent=0 // pred_check_branch
    %990 = sbr.rel (0) target = $region13
  $region12: #{_lambda_.8} parent=0 // pred_region
    _
  $region13: #{_lambda_.8} parent=0 // pred_fallthru
    _
  // Predicated region
  $region14: #{_lambda_.8} parent=0 // pred_check
    _
  $region15: #{_lambda_.8} parent=0 // pred_check_branch
    %992 = sbr.rel (0) target = $region17
  $region16: #{_lambda_.8} parent=0 // pred_region
    _
  $region17: #{_lambda_.8} parent=0 // pred_fallthru
    _

// kernel: _lambda_.10
$region0: #{_lambda_.10}
  #allocation0 [shape = 'u32[]', space=smem, size = 0x4, offset = 0x4, fixed_abs, tag = 'smem constant byte address 0x4 - core index']
  #allocation1 [shape = 'u32[72,128]{1,0:T(1,128)}', space=vmem, size = 0x9000, scoped, tag = 'internal scratch']
  %s0 = inlined_call_operand.vmem [shape: bf16[512,128], index: 0, kind: input, shape index: {}]
  %s1 = inlined_call_operand.vmem [shape: bf16[128,128], index: 1, kind: input, shape index: {}]
  %s2 = inlined_call_operand.vmem [shape: bf16[512,128], index: 2, kind: output, shape index: {}]
  %s3 = sld [smem:[#allocation0]]
  $region18: #{_lambda_.10} parent=0
    _
  %s5 = ssub.s32 1, %s3
  %s6 = scalar_select 0, %s5, %s3
  // Predicated region
  $region2: #{_lambda_.10} parent=0 // pred_check
    _
  $region3: #{_lambda_.10} parent=0 // pred_check_branch
    %8 = sbr.rel (0) target = $region5
  $region4: #{_lambda_.10} parent=0 // pred_region
    _
  $region5: #{_lambda_.10} parent=0 // pred_fallthru
    _
  // Predicated region
  $region6: #{_lambda_.10} parent=0 // pred_check
    _
  $region7: #{_lambda_.10} parent=0 // pred_check_branch
    %10 = sbr.rel (0) target = $region9
  $region8: #{_lambda_.10} parent=0 // pred_region
    _
  $region9: #{_lambda_.10} parent=0 // pred_fallthru
    _
  %v11 = vld [vmem:[%s0] sm:$0xf]
  %v12 = vld [vmem:[%s0 + $0x4] sm:$0xf]
  %v13 = vld [vmem:[%s0 + $0x8] sm:$0xf]
  %v14 = vld [vmem:[%s0 + $0xc] sm:$0xf]
  %v15 = vld [vmem:[%s0 + $0x10] sm:$0xf]
  %v16 = vld [vmem:[%s0 + $0x14] sm:$0xf]
  %v17 = vld [vmem:[%s0 + $0x18] sm:$0xf]
  %v18 = vld [vmem:[%s0 + $0x1c] sm:$0xf]
  %v19 = vld [vmem:[%s0 + $0x20] sm:$0xf]
  %v20 = vld [vmem:[%s0 + $0x24] sm:$0xf]
  %v21 = vld [vmem:[%s0 + $0x28] sm:$0xf]
  %v22 = vld [vmem:[%s0 + $0x2c] sm:$0xf]
  %v23 = vld [vmem:[%s0 + $0x30] sm:$0xf]
  %v24 = vld [vmem:[%s0 + $0x34] sm:$0xf]
  %v25 = vld [vmem:[%s0 + $0x38] sm:$0xf]
  %v26 = vld [vmem:[%s0 + $0x3c] sm:$0xf]
  %v27 = vld [vmem:[%s0 + $0x40] sm:$0xf]
  %v28 = vld [vmem:[%s0 + $0x44] sm:$0xf]
  %v29 = vld [vmem:[%s0 + $0x48] sm:$0xf]
  %v30 = vld [vmem:[%s0 + $0x4c] sm:$0xf]
  %v31 = vld [vmem:[%s0 + $0x50] sm:$0xf]
  %v32 = vld [vmem:[%s0 + $0x54] sm:$0xf]
  %v33 = vld [vmem:[%s0 + $0x58] sm:$0xf]
  %v34 = vld [vmem:[%s0 + $0x5c] sm:$0xf]
  %v35 = vld [vmem:[%s0 + $0x60] sm:$0xf]
  %v36 = vld [vmem:[%s0 + $0x64] sm:$0xf]
  %v37 = vld [vmem:[%s0 + $0x68] sm:$0xf]
  %v38 = vld [vmem:[%s0 + $0x6c] sm:$0xf]
  %v39 = vld [vmem:[%s0 + $0x70] sm:$0xf]
  %v40 = vld [vmem:[%s0 + $0x74] sm:$0xf]
  %v41 = vld [vmem:[%s0 + $0x78] sm:$0xf]
  %v42 = vld [vmem:[%s0 + $0x7c] sm:$0xf]
  %v43 = vld [vmem:[%s0 + $0x80] sm:$0xf]
  %v44 = vld [vmem:[%s0 + $0x84] sm:$0xf]
  %v45 = vld [vmem:[%s0 + $0x88] sm:$0xf]
  %v46 = vld [vmem:[%s0 + $0x8c] sm:$0xf]
  %v47 = vld [vmem:[%s0 + $0x90] sm:$0xf]
  %v48 = vld [vmem:[%s0 + $0x94] sm:$0xf]
  %v49 = vld [vmem:[%s0 + $0x98] sm:$0xf]
  %v50 = vld [vmem:[%s0 + $0x9c] sm:$0xf]
  %v51 = vld [vmem:[%s0 + $0xa0] sm:$0xf]
  %v52 = vld [vmem:[%s0 + $0xa4] sm:$0xf]
  %v53 = vld [vmem:[%s0 + $0xa8] sm:$0xf]
  %v54 = vld [vmem:[%s0 + $0xac] sm:$0xf]
  %v55 = vld [vmem:[%s0 + $0xb0] sm:$0xf]
  %v56 = vld [vmem:[%s0 + $0xb4] sm:$0xf]
  %v57 = vld [vmem:[%s0 + $0xb8] sm:$0xf]
  %v58 = vld [vmem:[%s0 + $0xbc] sm:$0xf]
  %v59 = vld [vmem:[%s0 + $0xc0] sm:$0xf]
  %v60 = vld [vmem:[%s0 + $0xc4] sm:$0xf]
  %v61 = vld [vmem:[%s0 + $0xc8] sm:$0xf]
  %v62 = vld [vmem:[%s0 + $0xcc] sm:$0xf]
  %v63 = vld [vmem:[%s0 + $0xd0] sm:$0xf]
  %v64 = vld [vmem:[%s0 + $0xd4] sm:$0xf]
  %v65 = vld [vmem:[%s0 + $0xd8] sm:$0xf]
  %v66 = vld [vmem:[%s0 + $0xdc] sm:$0xf]
  %v67 = vld [vmem:[%s0 + $0xe0] sm:$0xf]
  %v68 = vld [vmem:[%s0 + $0xe4] sm:$0xf]
  %v69 = vld [vmem:[%s0 + $0xe8] sm:$0xf]
  %v70 = vld [vmem:[%s0 + $0xec] sm:$0xf]
  %v71 = vld [vmem:[%s0 + $0xf0] sm:$0xf]
  %v72 = vld [vmem:[%s0 + $0xf4] sm:$0xf]
  %v73 = vld [vmem:[%s0 + $0xf8] sm:$0xf]
  %v74 = vld [vmem:[%s0 + $0xfc] sm:$0xf]
  %v75 = vld [vmem:[%s1] sm:$0xf]
  %v76 = vld [vmem:[%s1 + $0x4] sm:$0xf]
  %v77 = vld [vmem:[%s1 + $0x8] sm:$0xf]
  %v78 = vld [vmem:[%s1 + $0xc] sm:$0xf]
  %v79 = vld [vmem:[%s1 + $0x10] sm:$0xf]
  %v80 = vld [vmem:[%s1 + $0x14] sm:$0xf]
  %v81 = vld [vmem:[%s1 + $0x18] sm:$0xf]
  %v82 = vld [vmem:[%s1 + $0x1c] sm:$0xf]
  %v83 = vld [vmem:[%s1 + $0x20] sm:$0xf]
  %v84 = vld [vmem:[%s1 + $0x24] sm:$0xf]
  %v85 = vld [vmem:[%s1 + $0x28] sm:$0xf]
  %v86 = vld [vmem:[%s1 + $0x2c] sm:$0xf]
  %v87 = vld [vmem:[%s1 + $0x30] sm:$0xf]
  %v88 = vld [vmem:[%s1 + $0x34] sm:$0xf]
  %v89 = vld [vmem:[%s1 + $0x38] sm:$0xf]
  %v90 = vld [vmem:[%s1 + $0x3c] sm:$0xf]
  %v155 = vunpack.c.l.b16 %v11
  %v156 = vunpack.c.l.b16 %v12
  %v157 = vunpack.c.l.b16 %v13
  %v158 = vunpack.c.l.b16 %v14
  %v159 = vunpack.c.l.b16 %v15
  %v160 = vunpack.c.l.b16 %v16
  %v161 = vunpack.c.l.b16 %v17
  %v162 = vunpack.c.l.b16 %v18
  %v163 = vunpack.c.l.b16 %v19
  %v164 = vunpack.c.l.b16 %v20
  %v165 = vunpack.c.l.b16 %v21
  %v166 = vunpack.c.l.b16 %v22
  %v167 = vunpack.c.l.b16 %v23
  %v168 = vunpack.c.l.b16 %v24
  %v169 = vunpack.c.l.b16 %v25
  %v170 = vunpack.c.l.b16 %v26
  %v171 = vunpack.c.l.b16 %v27
  %v172 = vunpack.c.l.b16 %v28
  %v173 = vunpack.c.l.b16 %v29
  %v174 = vunpack.c.l.b16 %v30
  %v175 = vunpack.c.l.b16 %v31
  %v176 = vunpack.c.l.b16 %v32
  %v177 = vunpack.c.l.b16 %v33
  %v178 = vunpack.c.l.b16 %v34
  %v179 = vunpack.c.l.b16 %v35
  %v180 = vunpack.c.l.b16 %v36
  %v181 = vunpack.c.l.b16 %v37
  %v182 = vunpack.c.l.b16 %v38
  %v183 = vunpack.c.l.b16 %v39
  %v184 = vunpack.c.l.b16 %v40
  %v185 = vunpack.c.l.b16 %v41
  %v186 = vunpack.c.l.b16 %v42
  %v187 = vunpack.c.l.b16 %v43
  %v188 = vunpack.c.l.b16 %v44
  %v189 = vunpack.c.l.b16 %v45
  %v190 = vunpack.c.l.b16 %v46
  %v191 = vunpack.c.l.b16 %v47
  %v192 = vunpack.c.l.b16 %v48
  %v193 = vunpack.c.l.b16 %v49
  %v194 = vunpack.c.l.b16 %v50
  %v195 = vunpack.c.l.b16 %v51
  %v196 = vunpack.c.l.b16 %v52
  %v197 = vunpack.c.l.b16 %v53
  %v198 = vunpack.c.l.b16 %v54
  %v199 = vunpack.c.l.b16 %v55
  %v200 = vunpack.c.l.b16 %v56
  %v201 = vunpack.c.l.b16 %v57
  %v202 = vunpack.c.l.b16 %v58
  %v203 = vunpack.c.l.b16 %v59
  %v204 = vunpack.c.l.b16 %v60
  %v205 = vunpack.c.l.b16 %v61
  %v206 = vunpack.c.l.b16 %v62
  %v207 = vunpack.c.l.b16 %v63
  %v208 = vunpack.c.l.b16 %v64
  %v209 = vunpack.c.l.b16 %v65
  %v210 = vunpack.c.l.b16 %v66
  %v211 = vunpack.c.l.b16 %v67
  %v212 = vunpack.c.l.b16 %v68
  %v213 = vunpack.c.l.b16 %v69
  %v214 = vunpack.c.l.b16 %v70
  %v215 = vunpack.c.l.b16 %v71
  %v216 = vunpack.c.l.b16 %v72
  %v217 = vunpack.c.l.b16 %v73
  %v218 = vunpack.c.l.b16 %v74
  %v219 = vpack.c.b16 %v156, %v155
  %v220 = vpack.c.b16 %v158, %v157
  %v221 = vpack.c.b16 %v160, %v159
  %v222 = vpack.c.b16 %v162, %v161
  %v223 = vpack.c.b16 %v164, %v163
  %v224 = vpack.c.b16 %v166, %v165
  %v225 = vpack.c.b16 %v168, %v167
  %v226 = vpack.c.b16 %v170, %v169
  %v227 = vpack.c.b16 %v172, %v171
  %v228 = vpack.c.b16 %v174, %v173
  %v229 = vpack.c.b16 %v176, %v175
  %v230 = vpack.c.b16 %v178, %v177
  %v231 = vpack.c.b16 %v180, %v179
  %v232 = vpack.c.b16 %v182, %v181
  %v233 = vpack.c.b16 %v184, %v183
  %v234 = vpack.c.b16 %v186, %v185
  %v235 = vpack.c.b16 %v188, %v187
  %v236 = vpack.c.b16 %v190, %v189
  %v237 = vpack.c.b16 %v192, %v191
  %v238 = vpack.c.b16 %v194, %v193
  %v239 = vpack.c.b16 %v196, %v195
  %v240 = vpack.c.b16 %v198, %v197
  %v241 = vpack.c.b16 %v200, %v199
  %v242 = vpack.c.b16 %v202, %v201
  %v243 = vpack.c.b16 %v204, %v203
  %v244 = vpack.c.b16 %v206, %v205
  %v245 = vpack.c.b16 %v208, %v207
  %v246 = vpack.c.b16 %v210, %v209
  %v247 = vpack.c.b16 %v212, %v211
  %v248 = vpack.c.b16 %v214, %v213
  %v249 = vpack.c.b16 %v216, %v215
  %v250 = vpack.c.b16 %v218, %v217
  %v299 = vunpack.c.l.b16 %v75
  %v300 = vunpack.c.l.b16 %v76
  %v301 = vunpack.c.l.b16 %v77
  %v302 = vunpack.c.l.b16 %v78
  %v303 = vunpack.c.l.b16 %v79
  %v304 = vunpack.c.l.b16 %v80
  %v305 = vunpack.c.l.b16 %v81
  %v306 = vunpack.c.l.b16 %v82
  %v307 = vunpack.c.l.b16 %v83
  %v308 = vunpack.c.l.b16 %v84
  %v309 = vunpack.c.l.b16 %v85
  %v310 = vunpack.c.l.b16 %v86
  %v311 = vunpack.c.l.b16 %v87
  %v312 = vunpack.c.l.b16 %v88
  %v313 = vunpack.c.l.b16 %v89
  %v314 = vunpack.c.l.b16 %v90
  %v315 = vpack.c.b16 %v300, %v299
  %v316 = vpack.c.b16 %v302, %v301
  %v317 = vpack.c.b16 %v304, %v303
  %v318 = vpack.c.b16 %v306, %v305
  %v319 = vpack.c.b16 %v308, %v307
  %v320 = vpack.c.b16 %v310, %v309
  %v321 = vpack.c.b16 %v312, %v311
  %v322 = vpack.c.b16 %v314, %v313
  %331 = vmatpush.bf16.msra.mxu0 %v322
  %332 = vmatpush.bf16.msra.mxu0 %v321
  %333 = vmatpush.bf16.msra.mxu0 %v320
  %334 = vmatpush.bf16.msra.mxu0 %v319
  %335 = vmatpush.bf16.msra.mxu0 %v318
  %336 = vmatpush.bf16.msra.mxu0 %v317
  %337 = vmatpush.bf16.msra.mxu0 %v316
  %338 = vmatpush.bf16.msra.mxu0 %v315
  %339 = vmatmul.bf16.gmra.mxu0 %v219
  %v340 = vpop.f32.mrf.mxu0
  %v341 = vadd.f32 0.0, %v340
  %v342 = vpop.f32.mrf.mxu0
  %v343 = vadd.f32 0.0, %v342
  %344 = vmatmul.bf16.gmra.mxu0 %v220
  %v345 = vpop.f32.mrf.mxu0
  %v346 = vadd.f32 0.0, %v345
  %v347 = vpop.f32.mrf.mxu0
  %v348 = vadd.f32 0.0, %v347
  %349 = vmatmul.bf16.gmra.mxu0 %v221
  %v350 = vpop.f32.mrf.mxu0
  %v351 = vadd.f32 0.0, %v350
  %v352 = vpop.f32.mrf.mxu0
  %v353 = vadd.f32 0.0, %v352
  %354 = vmatmul.bf16.gmra.mxu0 %v222
  %v355 = vpop.f32.mrf.mxu0
  %v356 = vadd.f32 0.0, %v355
  %v357 = vpop.f32.mrf.mxu0
  %v358 = vadd.f32 0.0, %v357
  %359 = vmatmul.bf16.gmra.mxu0 %v223
  %v360 = vpop.f32.mrf.mxu0
  %v361 = vadd.f32 0.0, %v360
  %v362 = vpop.f32.mrf.mxu0
  %v363 = vadd.f32 0.0, %v362
  %364 = vmatmul.bf16.gmra.mxu0 %v224
  %v365 = vpop.f32.mrf.mxu0
  %v366 = vadd.f32 0.0, %v365
  %v367 = vpop.f32.mrf.mxu0
  %v368 = vadd.f32 0.0, %v367
  %369 = vmatmul.bf16.gmra.mxu0 %v225
  %v370 = vpop.f32.mrf.mxu0
  %v371 = vadd.f32 0.0, %v370
  %v372 = vpop.f32.mrf.mxu0
  %v373 = vadd.f32 0.0, %v372
  %374 = vmatmul.bf16.gmra.mxu0 %v226
  %v375 = vpop.f32.mrf.mxu0
  %v376 = vadd.f32 0.0, %v375
  %v377 = vpop.f32.mrf.mxu0
  %v378 = vadd.f32 0.0, %v377
  %379 = vmatmul.bf16.gmra.mxu0 %v227
  %v380 = vpop.f32.mrf.mxu0
  %v381 = vadd.f32 0.0, %v380
  %v382 = vpop.f32.mrf.mxu0
  %v383 = vadd.f32 0.0, %v382
  %384 = vmatmul.bf16.gmra.mxu0 %v228
  %v385 = vpop.f32.mrf.mxu0
  %v386 = vadd.f32 0.0, %v385
  %v387 = vpop.f32.mrf.mxu0
  %v388 = vadd.f32 0.0, %v387
  %389 = vmatmul.bf16.gmra.mxu0 %v229
  %v390 = vpop.f32.mrf.mxu0
  %v391 = vadd.f32 0.0, %v390
  %v392 = vpop.f32.mrf.mxu0
  %v393 = vadd.f32 0.0, %v392
  %394 = vmatmul.bf16.gmra.mxu0 %v230
  %v395 = vpop.f32.mrf.mxu0
  %v396 = vadd.f32 0.0, %v395
  %v397 = vpop.f32.mrf.mxu0
  %v398 = vadd.f32 0.0, %v397
  %399 = vmatmul.bf16.gmra.mxu0 %v231
  %v400 = vpop.f32.mrf.mxu0
  %v401 = vadd.f32 0.0, %v400
  %v402 = vpop.f32.mrf.mxu0
  %v403 = vadd.f32 0.0, %v402
  %404 = vmatmul.bf16.gmra.mxu0 %v232
  %v405 = vpop.f32.mrf.mxu0
  %v406 = vadd.f32 0.0, %v405
  %v407 = vpop.f32.mrf.mxu0
  %v408 = vadd.f32 0.0, %v407
  %409 = vmatmul.bf16.gmra.mxu0 %v233
  %v410 = vpop.f32.mrf.mxu0
  %v411 = vadd.f32 0.0, %v410
  %v412 = vpop.f32.mrf.mxu0
  %v413 = vadd.f32 0.0, %v412
  %414 = vmatmul.bf16.gmra.mxu0 %v234
  %v415 = vpop.f32.mrf.mxu0
  %v416 = vadd.f32 0.0, %v415
  %v417 = vpop.f32.mrf.mxu0
  %v418 = vadd.f32 0.0, %v417
  %419 = vmatmul.bf16.gmra.mxu0 %v235
  %v420 = vpop.f32.mrf.mxu0
  %v421 = vadd.f32 0.0, %v420
  %v422 = vpop.f32.mrf.mxu0
  %v423 = vadd.f32 0.0, %v422
  %424 = vmatmul.bf16.gmra.mxu0 %v236
  %v425 = vpop.f32.mrf.mxu0
  %v426 = vadd.f32 0.0, %v425
  %v427 = vpop.f32.mrf.mxu0
  %v428 = vadd.f32 0.0, %v427
  %429 = vmatmul.bf16.gmra.mxu0 %v237
  %v430 = vpop.f32.mrf.mxu0
  %v431 = vadd.f32 0.0, %v430
  %v432 = vpop.f32.mrf.mxu0
  %v433 = vadd.f32 0.0, %v432
  %434 = vmatmul.bf16.gmra.mxu0 %v238
  %v435 = vpop.f32.mrf.mxu0
  %v436 = vadd.f32 0.0, %v435
  %v437 = vpop.f32.mrf.mxu0
  %v438 = vadd.f32 0.0, %v437
  %439 = vmatmul.bf16.gmra.mxu0 %v239
  %v440 = vpop.f32.mrf.mxu0
  %v441 = vadd.f32 0.0, %v440
  %v442 = vpop.f32.mrf.mxu0
  %v443 = vadd.f32 0.0, %v442
  %444 = vmatmul.bf16.gmra.mxu0 %v240
  %v445 = vpop.f32.mrf.mxu0
  %v446 = vadd.f32 0.0, %v445
  %v447 = vpop.f32.mrf.mxu0
  %v448 = vadd.f32 0.0, %v447
  %449 = vmatmul.bf16.gmra.mxu0 %v241
  %v450 = vpop.f32.mrf.mxu0
  %v451 = vadd.f32 0.0, %v450
  %v452 = vpop.f32.mrf.mxu0
  %v453 = vadd.f32 0.0, %v452
  %454 = vmatmul.bf16.gmra.mxu0 %v242
  %v455 = vpop.f32.mrf.mxu0
  %v456 = vadd.f32 0.0, %v455
  %v457 = vpop.f32.mrf.mxu0
  %v458 = vadd.f32 0.0, %v457
  %459 = vmatmul.bf16.gmra.mxu0 %v243
  %v460 = vpop.f32.mrf.mxu0
  %v461 = vadd.f32 0.0, %v460
  %v462 = vpop.f32.mrf.mxu0
  %v463 = vadd.f32 0.0, %v462
  %464 = vmatmul.bf16.gmra.mxu0 %v244
  %v465 = vpop.f32.mrf.mxu0
  %v466 = vadd.f32 0.0, %v465
  %v467 = vpop.f32.mrf.mxu0
  %v468 = vadd.f32 0.0, %v467
  %469 = vmatmul.bf16.gmra.mxu0 %v245
  %v470 = vpop.f32.mrf.mxu0
  %v471 = vadd.f32 0.0, %v470
  %v472 = vpop.f32.mrf.mxu0
  %v473 = vadd.f32 0.0, %v472
  %474 = vmatmul.bf16.gmra.mxu0 %v246
  %v475 = vpop.f32.mrf.mxu0
  %v476 = vadd.f32 0.0, %v475
  %v477 = vpop.f32.mrf.mxu0
  %v478 = vadd.f32 0.0, %v477
  %479 = vmatmul.bf16.gmra.mxu0 %v247
  %v480 = vpop.f32.mrf.mxu0
  %v481 = vadd.f32 0.0, %v480
  %v482 = vpop.f32.mrf.mxu0
  %v483 = vadd.f32 0.0, %v482
  %484 = vmatmul.bf16.gmra.mxu0 %v248
  %v485 = vpop.f32.mrf.mxu0
  %v486 = vadd.f32 0.0, %v485
  %v487 = vpop.f32.mrf.mxu0
  %v488 = vadd.f32 0.0, %v487
  %489 = vmatmul.bf16.gmra.mxu0 %v249
  %v490 = vpop.f32.mrf.mxu0
  %v491 = vadd.f32 0.0, %v490
  %v492 = vpop.f32.mrf.mxu0
  %v493 = vadd.f32 0.0, %v492
  %494 = vmatmul.bf16.gmra.mxu0 %v250
  %v495 = vpop.f32.mrf.mxu0
  %v496 = vadd.f32 0.0, %v495
  %v497 = vpop.f32.mrf.mxu0
  %v498 = vadd.f32 0.0, %v497
  %499 = vdwg.mxu0
  %v500 = vpack.c.bf16 %v341, %v341
  %v501 = vpack.c.bf16 %v343, %v343
  %v502 = vpack.c.bf16 %v346, %v346
  %v503 = vpack.c.bf16 %v348, %v348
  %v504 = vpack.c.bf16 %v351, %v351
  %v505 = vpack.c.bf16 %v353, %v353
  %v506 = vpack.c.bf16 %v356, %v356
  %v507 = vpack.c.bf16 %v358, %v358
  %v508 = vpack.c.bf16 %v361, %v361
  %v509 = vpack.c.bf16 %v363, %v363
  %v510 = vpack.c.bf16 %v366, %v366
  %v511 = vpack.c.bf16 %v368, %v368
  %v512 = vpack.c.bf16 %v371, %v371
  %v513 = vpack.c.bf16 %v373, %v373
  %v514 = vpack.c.bf16 %v376, %v376
  %v515 = vpack.c.bf16 %v378, %v378
  %v516 = vpack.c.bf16 %v381, %v381
  %v517 = vpack.c.bf16 %v383, %v383
  %v518 = vpack.c.bf16 %v386, %v386
  %v519 = vpack.c.bf16 %v388, %v388
  %v520 = vpack.c.bf16 %v391, %v391
  %v521 = vpack.c.bf16 %v393, %v393
  %v522 = vpack.c.bf16 %v396, %v396
  %v523 = vpack.c.bf16 %v398, %v398
  %v524 = vpack.c.bf16 %v401, %v401
  %v525 = vpack.c.bf16 %v403, %v403
  %v526 = vpack.c.bf16 %v406, %v406
  %v527 = vpack.c.bf16 %v408, %v408
  %v528 = vpack.c.bf16 %v411, %v411
  %v529 = vpack.c.bf16 %v413, %v413
  %v530 = vpack.c.bf16 %v416, %v416
  %v531 = vpack.c.bf16 %v418, %v418
  %v532 = vpack.c.bf16 %v421, %v421
  %v533 = vpack.c.bf16 %v423, %v423
  %v534 = vpack.c.bf16 %v426, %v426
  %v535 = vpack.c.bf16 %v428, %v428
  %v536 = vpack.c.bf16 %v431, %v431
  %v537 = vpack.c.bf16 %v433, %v433
  %v538 = vpack.c.bf16 %v436, %v436
  %v539 = vpack.c.bf16 %v438, %v438
  %v540 = vpack.c.bf16 %v441, %v441
  %v541 = vpack.c.bf16 %v443, %v443
  %v542 = vpack.c.bf16 %v446, %v446
  %v543 = vpack.c.bf16 %v448, %v448
  %v544 = vpack.c.bf16 %v451, %v451
  %v545 = vpack.c.bf16 %v453, %v453
  %v546 = vpack.c.bf16 %v456, %v456
  %v547 = vpack.c.bf16 %v458, %v458
  %v548 = vpack.c.bf16 %v461, %v461
  %v549 = vpack.c.bf16 %v463, %v463
  %v550 = vpack.c.bf16 %v466, %v466
  %v551 = vpack.c.bf16 %v468, %v468
  %v552 = vpack.c.bf16 %v471, %v471
  %v553 = vpack.c.bf16 %v473, %v473
  %v554 = vpack.c.bf16 %v476, %v476
  %v555 = vpack.c.bf16 %v478, %v478
  %v556 = vpack.c.bf16 %v481, %v481
  %v557 = vpack.c.bf16 %v483, %v483
  %v558 = vpack.c.bf16 %v486, %v486
  %v559 = vpack.c.bf16 %v488, %v488
  %v560 = vpack.c.bf16 %v491, %v491
  %v561 = vpack.c.bf16 %v493, %v493
  %v562 = vpack.c.bf16 %v496, %v496
  %v563 = vpack.c.bf16 %v498, %v498
  %564 = vst [vmem:[%s2] sm:$0xf] %v500
  %565 = vst [vmem:[%s2 + $0x4] sm:$0xf] %v501
  %566 = vst [vmem:[%s2 + $0x8] sm:$0xf] %v502
  %567 = vst [vmem:[%s2 + $0xc] sm:$0xf] %v503
  %568 = vst [vmem:[%s2 + $0x10] sm:$0xf] %v504
  %569 = vst [vmem:[%s2 + $0x14] sm:$0xf] %v505
  %570 = vst [vmem:[%s2 + $0x18] sm:$0xf] %v506
  %571 = vst [vmem:[%s2 + $0x1c] sm:$0xf] %v507
  %572 = vst [vmem:[%s2 + $0x20] sm:$0xf] %v508
  %573 = vst [vmem:[%s2 + $0x24] sm:$0xf] %v509
  %574 = vst [vmem:[%s2 + $0x28] sm:$0xf] %v510
  %575 = vst [vmem:[%s2 + $0x2c] sm:$0xf] %v511
  %576 = vst [vmem:[%s2 + $0x30] sm:$0xf] %v512
  %577 = vst [vmem:[%s2 + $0x34] sm:$0xf] %v513
  %578 = vst [vmem:[%s2 + $0x38] sm:$0xf] %v514
  %579 = vst [vmem:[%s2 + $0x3c] sm:$0xf] %v515
  %580 = vst [vmem:[%s2 + $0x40] sm:$0xf] %v516
  %581 = vst [vmem:[%s2 + $0x44] sm:$0xf] %v517
  %582 = vst [vmem:[%s2 + $0x48] sm:$0xf] %v518
  %583 = vst [vmem:[%s2 + $0x4c] sm:$0xf] %v519
  %584 = vst [vmem:[%s2 + $0x50] sm:$0xf] %v520
  %585 = vst [vmem:[%s2 + $0x54] sm:$0xf] %v521
  %586 = vst [vmem:[%s2 + $0x58] sm:$0xf] %v522
  %587 = vst [vmem:[%s2 + $0x5c] sm:$0xf] %v523
  %588 = vst [vmem:[%s2 + $0x60] sm:$0xf] %v524
  %589 = vst [vmem:[%s2 + $0x64] sm:$0xf] %v525
  %590 = vst [vmem:[%s2 + $0x68] sm:$0xf] %v526
  %591 = vst [vmem:[%s2 + $0x6c] sm:$0xf] %v527
  %592 = vst [vmem:[%s2 + $0x70] sm:$0xf] %v528
  %593 = vst [vmem:[%s2 + $0x74] sm:$0xf] %v529
  %594 = vst [vmem:[%s2 + $0x78] sm:$0xf] %v530
  %595 = vst [vmem:[%s2 + $0x7c] sm:$0xf] %v531
  %596 = vst [vmem:[%s2 + $0x80] sm:$0xf] %v532
  %597 = vst [vmem:[%s2 + $0x84] sm:$0xf] %v533
  %598 = vst [vmem:[%s2 + $0x88] sm:$0xf] %v534
  %599 = vst [vmem:[%s2 + $0x8c] sm:$0xf] %v535
  %600 = vst [vmem:[%s2 + $0x90] sm:$0xf] %v536
  %601 = vst [vmem:[%s2 + $0x94] sm:$0xf] %v537
  %602 = vst [vmem:[%s2 + $0x98] sm:$0xf] %v538
  %603 = vst [vmem:[%s2 + $0x9c] sm:$0xf] %v539
  %604 = vst [vmem:[%s2 + $0xa0] sm:$0xf] %v540
  %605 = vst [vmem:[%s2 + $0xa4] sm:$0xf] %v541
  %606 = vst [vmem:[%s2 + $0xa8] sm:$0xf] %v542
  %607 = vst [vmem:[%s2 + $0xac] sm:$0xf] %v543
  %608 = vst [vmem:[%s2 + $0xb0] sm:$0xf] %v544
  %609 = vst [vmem:[%s2 + $0xb4] sm:$0xf] %v545
  %610 = vst [vmem:[%s2 + $0xb8] sm:$0xf] %v546
  %611 = vst [vmem:[%s2 + $0xbc] sm:$0xf] %v547
  %612 = vst [vmem:[%s2 + $0xc0] sm:$0xf] %v548
  %613 = vst [vmem:[%s2 + $0xc4] sm:$0xf] %v549
  %614 = vst [vmem:[%s2 + $0xc8] sm:$0xf] %v550
  %615 = vst [vmem:[%s2 + $0xcc] sm:$0xf] %v551
  %616 = vst [vmem:[%s2 + $0xd0] sm:$0xf] %v552
  %617 = vst [vmem:[%s2 + $0xd4] sm:$0xf] %v553
  %618 = vst [vmem:[%s2 + $0xd8] sm:$0xf] %v554
  %619 = vst [vmem:[%s2 + $0xdc] sm:$0xf] %v555
  %620 = vst [vmem:[%s2 + $0xe0] sm:$0xf] %v556
  %621 = vst [vmem:[%s2 + $0xe4] sm:$0xf] %v557
  %622 = vst [vmem:[%s2 + $0xe8] sm:$0xf] %v558
  %623 = vst [vmem:[%s2 + $0xec] sm:$0xf] %v559
  %624 = vst [vmem:[%s2 + $0xf0] sm:$0xf] %v560
  %625 = vst [vmem:[%s2 + $0xf4] sm:$0xf] %v561
  %626 = vst [vmem:[%s2 + $0xf8] sm:$0xf] %v562
  %627 = vst [vmem:[%s2 + $0xfc] sm:$0xf] %v563
  // Predicated region
  $region10: #{_lambda_.10} parent=0 // pred_check
    _
  $region11: #{_lambda_.10} parent=0 // pred_check_branch
    %629 = sbr.rel (0) target = $region13
  $region12: #{_lambda_.10} parent=0 // pred_region
    _
  $region13: #{_lambda_.10} parent=0 // pred_fallthru
    _
  // Predicated region
  $region14: #{_lambda_.10} parent=0 // pred_check
    _
  $region15: #{_lambda_.10} parent=0 // pred_check_branch
    %631 = sbr.rel (0) target = $region17
  $region16: #{_lambda_.10} parent=0 // pred_region
    _
  $region17: #{_lambda_.10} parent=0 // pred_fallthru
    _

// kernel: _lambda_.11
$region0: #{_lambda_.11}
  #allocation0 [shape = 'u32[]', space=smem, size = 0x4, offset = 0x4, fixed_abs, tag = 'smem constant byte address 0x4 - core index']
  #allocation1 [shape = 'u32[72,128]{1,0:T(1,128)}', space=vmem, size = 0x9000, scoped, tag = 'internal scratch']
  %s0 = inlined_call_operand.vmem [shape: bf16[2,128,128], index: 0, kind: input, shape index: {}]
  %s1 = inlined_call_operand.vmem [shape: f32[2,1,128], index: 1, kind: input, shape index: {}]
  %s2 = inlined_call_operand.vmem [shape: f32[2,1,128], index: 2, kind: input, shape index: {}]
  %s3 = inlined_call_operand.vmem [shape: f32[2,128,128], index: 3, kind: input, shape index: {}]
  %s4 = inlined_call_operand.vmem [shape: f32[2,128,128], index: 4, kind: output, shape index: {}]
  %s5 = sld [smem:[#allocation0]]
  $region49: #{_lambda_.11} parent=0
    _
  %s7 = ssub.s32 1, %s5
  %s8 = scalar_select 0, %s7, %s5
  loop: start=0, step=1, limit=4
  $region2: #{_lambda_.11} parent=0 // loop_pre_header
    _
  $region3: #{_lambda_.11} parent=0 // loop_header
    %s10 = sphi 0, %s14
    %p11 = scmp.ge.s32.totalorder %s10, 4
    %s17 = sphi 0, %s29
    %s18 = sphi 0, %s25
    %s19 = sphi 0, %s17
    %s20 = sphi 0, %s18
    %s21 = sphi 0, %s19
    %s22 = sphi 0, %s20
    %s34 = sphi 0, %s36
    %s37 = sphi 0, %s34
    %s38 = sphi 0, %s37
    %s54 = sphi 0, %s38
    %s60 = sphi 0, %s62
    %s63 = sphi 0, %s60
    %s64 = sphi 0, %s63
    %s80 = sphi 0, %s64
    %s86 = sphi 0, %s88
    %s89 = sphi 0, %s86
    %s90 = sphi 0, %s89
    %s106 = sphi 0, %s90
    %s114 = sphi 0, %s116
    %s117 = sphi 0, %s114
    %s118 = sphi 0, %s117
    %s134 = sphi 0, %s118
    %s142 = sphi 0, %s144
    %s145 = sphi 0, %s142
    %s146 = sphi 0, %s145
    %s162 = sphi 0, %s146
  $region4: #{_lambda_.11} parent=0 // loop_header_branch
    %13 = sbr.rel (%p11) target = $region8
  $region5: #{_lambda_.11} parent=0 // loop_body
    %s15 = ssub.s32 %s10, 1
    %s16 = ssub.s32 %s10, 2
    %s23 = sadd.s32 1, %s18
    %p24 = scmp.ge.s32.totalorder %s23, 1
    %s25 = scalar_select %p24, 0, %s23
    %s26 = sadd.s32 1, %s17
    %s27 = scalar_select %p24, %s26, %s17
    %p28 = scmp.ge.s32.totalorder %s27, 2
    %s29 = scalar_select %p28, 0, %s27
    %s30 = ssub.s32 %s17, %s29
    %s31 = ssub.s32 %s18, %s25
    %s32 = sor.u32 %s30, %s31
    %p33 = scmp.eq.s32.totalorder %s32, 0
    %s35 = sadd.s32 %s34, 1
    %s36 = scalar_select %p33, %s34, %s35
    %p39 = pneg %p33
    %p40 = scmp.eq.s32.totalorder %s10, 1
    %p41 = por %p39, %p40
    %p42 = scmp.ne.s32.totalorder %s34, %s37
    %p43 = scmp.eq.s32.totalorder %s10, 0
    %p44 = por %p42, %p43
    %p45 = scmp.ne.s32.totalorder %s34, %s37
    %p46 = scmp.eq.s32.totalorder %s15, 1
    %p47 = por %p45, %p46
    %p48 = scmp.ne.s32.totalorder %s37, %s38
    %p49 = scmp.eq.s32.totalorder %s15, 0
    %p50 = por %p48, %p49
    %p51 = scmp.ne.s32.totalorder %s37, %s38
    %p52 = scmp.eq.s32.totalorder %s16, 1
    %p53 = por %p51, %p52
    %p55 = scmp.ne.s32.totalorder %s38, %s54
    %p56 = scmp.eq.s32.totalorder %s16, 0
    %p57 = por %p55, %p56
    %s58 = ssub.s32 %s17, %s29
    %p59 = scmp.eq.s32.totalorder %s58, 0
    %s61 = sadd.s32 %s60, 1
    %s62 = scalar_select %p59, %s60, %s61
    %p65 = pneg %p59
    %p66 = scmp.eq.s32.totalorder %s10, 1
    %p67 = por %p65, %p66
    %p68 = scmp.ne.s32.totalorder %s60, %s63
    %p69 = scmp.eq.s32.totalorder %s10, 0
    %p70 = por %p68, %p69
    %p71 = scmp.ne.s32.totalorder %s60, %s63
    %p72 = scmp.eq.s32.totalorder %s15, 1
    %p73 = por %p71, %p72
    %p74 = scmp.ne.s32.totalorder %s63, %s64
    %p75 = scmp.eq.s32.totalorder %s15, 0
    %p76 = por %p74, %p75
    %p77 = scmp.ne.s32.totalorder %s63, %s64
    %p78 = scmp.eq.s32.totalorder %s16, 1
    %p79 = por %p77, %p78
    %p81 = scmp.ne.s32.totalorder %s64, %s80
    %p82 = scmp.eq.s32.totalorder %s16, 0
    %p83 = por %p81, %p82
    %s84 = ssub.s32 %s17, %s29
    %p85 = scmp.eq.s32.totalorder %s84, 0
    %s87 = sadd.s32 %s86, 1
    %s88 = scalar_select %p85, %s86, %s87
    %p91 = pneg %p85
    %p92 = scmp.eq.s32.totalorder %s10, 1
    %p93 = por %p91, %p92
    %p94 = scmp.ne.s32.totalorder %s86, %s89
    %p95 = scmp.eq.s32.totalorder %s10, 0
    %p96 = por %p94, %p95
    %p97 = scmp.ne.s32.totalorder %s86, %s89
    %p98 = scmp.eq.s32.totalorder %s15, 1
    %p99 = por %p97, %p98
    %p100 = scmp.ne.s32.totalorder %s89, %s90
    %p101 = scmp.eq.s32.totalorder %s15, 0
    %p102 = por %p100, %p101
    %p103 = scmp.ne.s32.totalorder %s89, %s90
    %p104 = scmp.eq.s32.totalorder %s16, 1
    %p105 = por %p103, %p104
    %p107 = scmp.ne.s32.totalorder %s90, %s106
    %p108 = scmp.eq.s32.totalorder %s16, 0
    %p109 = por %p107, %p108
    %s110 = ssub.s32 %s17, %s29
    %s111 = ssub.s32 %s18, %s25
    %s112 = sor.u32 %s110, %s111
    %p113 = scmp.eq.s32.totalorder %s112, 0
    %s115 = sadd.s32 %s114, 1
    %s116 = scalar_select %p113, %s114, %s115
    %p119 = pneg %p113
    %p120 = scmp.eq.s32.totalorder %s10, 1
    %p121 = por %p119, %p120
    %p122 = scmp.ne.s32.totalorder %s114, %s117
    %p123 = scmp.eq.s32.totalorder %s10, 0
    %p124 = por %p122, %p123
    %p125 = scmp.ne.s32.totalorder %s114, %s117
    %p126 = scmp.eq.s32.totalorder %s15, 1
    %p127 = por %p125, %p126
    %p128 = scmp.ne.s32.totalorder %s117, %s118
    %p129 = scmp.eq.s32.totalorder %s15, 0
    %p130 = por %p128, %p129
    %p131 = scmp.ne.s32.totalorder %s117, %s118
    %p132 = scmp.eq.s32.totalorder %s16, 1
    %p133 = por %p131, %p132
    %p135 = scmp.ne.s32.totalorder %s118, %s134
    %p136 = scmp.eq.s32.totalorder %s16, 0
    %p137 = por %p135, %p136
    %s138 = ssub.s32 %s17, %s29
    %s139 = ssub.s32 %s18, %s25
    %s140 = sor.u32 %s138, %s139
    %p141 = scmp.eq.s32.totalorder %s140, 0
    %s143 = sadd.s32 %s142, 1
    %s144 = scalar_select %p141, %s142, %s143
    %p147 = pneg %p141
    %p148 = scmp.eq.s32.totalorder %s10, 1
    %p149 = por %p147, %p148
    %p150 = scmp.ne.s32.totalorder %s142, %s145
    %p151 = scmp.eq.s32.totalorder %s10, 0
    %p152 = por %p150, %p151
    %p153 = scmp.ne.s32.totalorder %s142, %s145
    %p154 = scmp.eq.s32.totalorder %s15, 1
    %p155 = por %p153, %p154
    %p156 = scmp.ne.s32.totalorder %s145, %s146
    %p157 = scmp.eq.s32.totalorder %s15, 0
    %p158 = por %p156, %p157
    %p159 = scmp.ne.s32.totalorder %s145, %s146
    %p160 = scmp.eq.s32.totalorder %s16, 1
    %p161 = por %p159, %p160
    %p163 = scmp.ne.s32.totalorder %s146, %s162
    %p164 = scmp.eq.s32.totalorder %s16, 0
    %p165 = por %p163, %p164
    %p166 = scmp.le.s32.totalorder 1, %s10
    %p167 = scmp.lt.s32.totalorder %s10, 3
    %p168 = pnand %p166, %p167
    %p169 = pneg %p168
    // Predicated region
    $region9: #{_lambda_.11} parent=5 // pred_check
      _
    $region10: #{_lambda_.11} parent=5 // pred_check_branch
      %171 = sbr.rel (%p168) target = $region12
    $region11: #{_lambda_.11} parent=5 // pred_region
      %s172 = ssub.s32 %s10, 1
    $region12: #{_lambda_.11} parent=5 // pred_fallthru
      _
    %p173 = scmp.lt.s32.totalorder %s10, 2
    // Predicated region
    $region13: #{_lambda_.11} parent=5 // pred_check
      %p174 = pneg %p173
    $region14: #{_lambda_.11} parent=5 // pred_check_branch
      %176 = sbr.rel (%p174) target = $region16
    $region15: #{_lambda_.11} parent=5 // pred_region
      // Predicated region
      $region17: #{_lambda_.11} parent=15 // pred_check
        %p177 = pneg %p44
      $region18: #{_lambda_.11} parent=15 // pred_check_branch
        %179 = sbr.rel (%p177) target = $region20
      $region19: #{_lambda_.11} parent=15 // pred_region
        %s180 = smul.u32 16, %s18
        %p181 = scmp.lt.s32.totalorder %s17, 1
        %s182 = scalar_select %p181, %s17, 1
        %p183 = scmp.lt.s32.totalorder %s180, 15
        %s184 = scalar_select %p183, %s180, 15
        %s185 = smul.addr %s182, 16
        %s186 = sadd.s32 %s184, %s185
        %s187 = smul.addr %s186, 4
        %s188 = scalar_lea.vmem %s0, %s187
        %s189 = smul.u32 16, %s18
      $region20: #{_lambda_.11} parent=15 // pred_fallthru
        _
      // Predicated region
      $region21: #{_lambda_.11} parent=15 // pred_check
        %p190 = pneg %p70
      $region22: #{_lambda_.11} parent=15 // pred_check_branch
        %192 = sbr.rel (%p190) target = $region24
      $region23: #{_lambda_.11} parent=15 // pred_region
        %p193 = scmp.lt.s32.totalorder %s17, 1
        %s194 = scalar_select %p193, %s17, 1
        %s195 = scalar_lea.vmem %s1, %s194
      $region24: #{_lambda_.11} parent=15 // pred_fallthru
        _
      // Predicated region
      $region25: #{_lambda_.11} parent=15 // pred_check
        %p196 = pneg %p96
      $region26: #{_lambda_.11} parent=15 // pred_check_branch
        %198 = sbr.rel (%p196) target = $region28
      $region27: #{_lambda_.11} parent=15 // pred_region
        %p199 = scmp.lt.s32.totalorder %s17, 1
        %s200 = scalar_select %p199, %s17, 1
        %s201 = scalar_lea.vmem %s2, %s200
      $region28: #{_lambda_.11} parent=15 // pred_fallthru
        _
      // Predicated region
      $region29: #{_lambda_.11} parent=15 // pred_check
        %p202 = pneg %p124
      $region30: #{_lambda_.11} parent=15 // pred_check_branch
        %204 = sbr.rel (%p202) target = $region32
      $region31: #{_lambda_.11} parent=15 // pred_region
        %s205 = smul.u32 16, %s18
        %p206 = scmp.lt.s32.totalorder %s17, 1
        %s207 = scalar_select %p206, %s17, 1
        %p208 = scmp.lt.s32.totalorder %s205, 15
        %s209 = scalar_select %p208, %s205, 15
        %s210 = smul.addr %s207, 16
        %s211 = sadd.s32 %s209, %s210
        %s212 = smul.addr %s211, 8
        %s213 = scalar_lea.vmem %s3, %s212
        %s214 = smul.u32 16, %s18
      $region32: #{_lambda_.11} parent=15 // pred_fallthru
        _
    $region16: #{_lambda_.11} parent=5 // pred_fallthru
      _
    %p215 = scmp.le.s32.totalorder 1, %s10
    %p216 = scmp.lt.s32.totalorder %s10, 3
    %p217 = pnand %p215, %p216
    %p218 = pneg %p217
    // Predicated region
    $region33: #{_lambda_.11} parent=5 // pred_check
      _
    $region34: #{_lambda_.11} parent=5 // pred_check_branch
      %220 = sbr.rel (%p217) target = $region36
    $region35: #{_lambda_.11} parent=5 // pred_region
      %s221 = ssub.s32 %s10, 1
      %s222 = smul.u32 16, %s20
      %p223 = scmp.lt.s32.totalorder %s19, 1
      %s224 = scalar_select %p223, %s19, 1
      %p225 = scmp.lt.s32.totalorder %s222, 15
      %s226 = scalar_select %p225, %s222, 15
      %s227 = smul.addr %s224, 16
      %s228 = sadd.s32 %s226, %s227
      %s229 = smul.addr %s228, 4
      %s230 = scalar_lea.vmem %s0, %s229
      %p231 = pneg %p50
      %p232 = pneg %p47
      %p233 = scmp.lt.s32.totalorder %s19, 1
      %s234 = scalar_select %p233, %s19, 1
      %s235 = scalar_lea.vmem %s1, %s234
      %p236 = pneg %p76
      %p237 = pneg %p73
      %p238 = scmp.lt.s32.totalorder %s19, 1
      %s239 = scalar_select %p238, %s19, 1
      %s240 = scalar_lea.vmem %s2, %s239
      %p241 = pneg %p102
      %p242 = pneg %p99
      %s243 = smul.u32 16, %s20
      %p244 = scmp.lt.s32.totalorder %s19, 1
      %s245 = scalar_select %p244, %s19, 1
      %p246 = scmp.lt.s32.totalorder %s243, 15
      %s247 = scalar_select %p246, %s243, 15
      %s248 = smul.addr %s245, 16
      %s249 = sadd.s32 %s247, %s248
      %s250 = smul.addr %s249, 8
      %s251 = scalar_lea.vmem %s3, %s250
      %p252 = pneg %p130
      %p253 = pneg %p127
      %p254 = pneg %p158
      %p255 = pneg %p155
      %s256 = smul.u32 16, %s20
      %p257 = scmp.lt.s32.totalorder %s19, 1
      %s258 = scalar_select %p257, %s19, 1
      %p259 = scmp.lt.s32.totalorder %s256, 15
      %s260 = scalar_select %p259, %s256, 15
      %s261 = smul.addr %s258, 16
      %s262 = sadd.s32 %s260, %s261
      %s263 = smul.addr %s262, 8
      %s264 = scalar_lea.vmem %s4, %s263
      %s265 = smul.u32 16, %s20
      %p266 = scmp.lt.s32.totalorder %s19, 1
      %s267 = scalar_select %p266, %s19, 1
      %p268 = scmp.lt.s32.totalorder %s265, 15
      %s269 = scalar_select %p268, %s265, 15
      %s270 = smul.addr %s267, 16
      %s271 = sadd.s32 %s269, %s270
      %s272 = smul.addr %s271, 4
      %s273 = scalar_lea.vmem %s0, %s272
      %s274 = smul.u32 16, %s20
      %p275 = scmp.lt.s32.totalorder %s19, 1
      %s276 = scalar_select %p275, %s19, 1
      %s277 = scalar_lea.vmem %s1, %s276
      %p278 = scmp.lt.s32.totalorder %s19, 1
      %s279 = scalar_select %p278, %s19, 1
      %s280 = scalar_lea.vmem %s2, %s279
      %s281 = smul.u32 16, %s20
      %p282 = scmp.lt.s32.totalorder %s19, 1
      %s283 = scalar_select %p282, %s19, 1
      %p284 = scmp.lt.s32.totalorder %s281, 15
      %s285 = scalar_select %p284, %s281, 15
      %s286 = smul.addr %s283, 16
      %s287 = sadd.s32 %s285, %s286
      %s288 = smul.addr %s287, 8
      %s289 = scalar_lea.vmem %s3, %s288
      %s290 = smul.u32 16, %s20
      %s291 = smul.u32 16, %s20
      %p292 = scmp.lt.s32.totalorder %s19, 1
      %s293 = scalar_select %p292, %s19, 1
      %p294 = scmp.lt.s32.totalorder %s291, 15
      %s295 = scalar_select %p294, %s291, 15
      %s296 = smul.addr %s293, 16
      %s297 = sadd.s32 %s295, %s296
      %s298 = smul.addr %s297, 8
      %s299 = scalar_lea.vmem %s4, %s298
      %s300 = smul.u32 16, %s20
      %v301 = vld [vmem:[%s273] sm:$0xf]
      %v302 = vld [vmem:[%s273 + $0x4] sm:$0xf]
      %v303 = vld [vmem:[%s273 + $0x8] sm:$0xf]
      %v304 = vld [vmem:[%s273 + $0xc] sm:$0xf]
      %v305 = vld [vmem:[%s273 + $0x10] sm:$0xf]
      %v306 = vld [vmem:[%s273 + $0x14] sm:$0xf]
      %v307 = vld [vmem:[%s273 + $0x18] sm:$0xf]
      %v308 = vld [vmem:[%s273 + $0x1c] sm:$0xf]
      %v309 = vld [vmem:[%s273 + $0x20] sm:$0xf]
      %v310 = vld [vmem:[%s273 + $0x24] sm:$0xf]
      %v311 = vld [vmem:[%s273 + $0x28] sm:$0xf]
      %v312 = vld [vmem:[%s273 + $0x2c] sm:$0xf]
      %v313 = vld [vmem:[%s273 + $0x30] sm:$0xf]
      %v314 = vld [vmem:[%s273 + $0x34] sm:$0xf]
      %v315 = vld [vmem:[%s273 + $0x38] sm:$0xf]
      %v316 = vld [vmem:[%s273 + $0x3c] sm:$0xf]
      %v317 = vunpack.c.l.bf16 %v301
      %v318 = vunpack.c.l.bf16 %v302
      %v319 = vunpack.c.l.bf16 %v303
      %v320 = vunpack.c.l.bf16 %v304
      %v321 = vunpack.c.l.bf16 %v305
      %v322 = vunpack.c.l.bf16 %v306
      %v323 = vunpack.c.l.bf16 %v307
      %v324 = vunpack.c.l.bf16 %v308
      %v325 = vunpack.c.l.bf16 %v309
      %v326 = vunpack.c.l.bf16 %v310
      %v327 = vunpack.c.l.bf16 %v311
      %v328 = vunpack.c.l.bf16 %v312
      %v329 = vunpack.c.l.bf16 %v313
      %v330 = vunpack.c.l.bf16 %v314
      %v331 = vunpack.c.l.bf16 %v315
      %v332 = vunpack.c.l.bf16 %v316
      %v333 = vld [vmem:[%s277] sm:$0x1]
      %v335 = vperm.slane %v333, 0
      %v337 = vmul.f32 %v317, %v335
      %v338 = vmul.f32 %v318, %v335
      %v339 = vmul.f32 %v319, %v335
      %v340 = vmul.f32 %v320, %v335
      %v341 = vmul.f32 %v321, %v335
      %v342 = vmul.f32 %v322, %v335
      %v343 = vmul.f32 %v323, %v335
      %v344 = vmul.f32 %v324, %v335
      %v345 = vmul.f32 %v325, %v335
      %v346 = vmul.f32 %v326, %v335
      %v347 = vmul.f32 %v327, %v335
      %v348 = vmul.f32 %v328, %v335
      %v349 = vmul.f32 %v329, %v335
      %v350 = vmul.f32 %v330, %v335
      %v351 = vmul.f32 %v331, %v335
      %v352 = vmul.f32 %v332, %v335
      %v353 = vld [vmem:[%s280] sm:$0x1]
      %v355 = vperm.slane %v353, 0
      %v357 = vadd.f32 %v337, %v355
      %v358 = vadd.f32 %v338, %v355
      %v359 = vadd.f32 %v339, %v355
      %v360 = vadd.f32 %v340, %v355
      %v361 = vadd.f32 %v341, %v355
      %v362 = vadd.f32 %v342, %v355
      %v363 = vadd.f32 %v343, %v355
      %v364 = vadd.f32 %v344, %v355
      %v365 = vadd.f32 %v345, %v355
      %v366 = vadd.f32 %v346, %v355
      %v367 = vadd.f32 %v347, %v355
      %v368 = vadd.f32 %v348, %v355
      %v369 = vadd.f32 %v349, %v355
      %v370 = vadd.f32 %v350, %v355
      %v371 = vadd.f32 %v351, %v355
      %v372 = vadd.f32 %v352, %v355
      %v373 = vld [vmem:[%s289] sm:$0xff]
      %v374 = vld [vmem:[%s289 + $0x8] sm:$0xff]
      %v375 = vld [vmem:[%s289 + $0x10] sm:$0xff]
      %v376 = vld [vmem:[%s289 + $0x18] sm:$0xff]
      %v377 = vld [vmem:[%s289 + $0x20] sm:$0xff]
      %v378 = vld [vmem:[%s289 + $0x28] sm:$0xff]
      %v379 = vld [vmem:[%s289 + $0x30] sm:$0xff]
      %v380 = vld [vmem:[%s289 + $0x38] sm:$0xff]
      %v381 = vld [vmem:[%s289 + $0x40] sm:$0xff]
      %v382 = vld [vmem:[%s289 + $0x48] sm:$0xff]
      %v383 = vld [vmem:[%s289 + $0x50] sm:$0xff]
      %v384 = vld [vmem:[%s289 + $0x58] sm:$0xff]
      %v385 = vld [vmem:[%s289 + $0x60] sm:$0xff]
      %v386 = vld [vmem:[%s289 + $0x68] sm:$0xff]
      %v387 = vld [vmem:[%s289 + $0x70] sm:$0xff]
      %v388 = vld [vmem:[%s289 + $0x78] sm:$0xff]
      %v389 = vadd.f32 %v357, %v373
      %v390 = vadd.f32 %v358, %v374
      %v391 = vadd.f32 %v359, %v375
      %v392 = vadd.f32 %v360, %v376
      %v393 = vadd.f32 %v361, %v377
      %v394 = vadd.f32 %v362, %v378
      %v395 = vadd.f32 %v363, %v379
      %v396 = vadd.f32 %v364, %v380
      %v397 = vadd.f32 %v365, %v381
      %v398 = vadd.f32 %v366, %v382
      %v399 = vadd.f32 %v367, %v383
      %v400 = vadd.f32 %v368, %v384
      %v401 = vadd.f32 %v369, %v385
      %v402 = vadd.f32 %v370, %v386
      %v403 = vadd.f32 %v371, %v387
      %v404 = vadd.f32 %v372, %v388
      %v405 = vmax.f32 %v389, 0.0
      %v406 = vmax.f32 %v390, 0.0
      %v407 = vmax.f32 %v391, 0.0
      %v408 = vmax.f32 %v392, 0.0
      %v409 = vmax.f32 %v393, 0.0
      %v410 = vmax.f32 %v394, 0.0
      %v411 = vmax.f32 %v395, 0.0
      %v412 = vmax.f32 %v396, 0.0
      %v413 = vmax.f32 %v397, 0.0
      %v414 = vmax.f32 %v398, 0.0
      %v415 = vmax.f32 %v399, 0.0
      %v416 = vmax.f32 %v400, 0.0
      %v417 = vmax.f32 %v401, 0.0
      %v418 = vmax.f32 %v402, 0.0
      %v419 = vmax.f32 %v403, 0.0
      %v420 = vmax.f32 %v404, 0.0
      %421 = vst [vmem:[%s299] sm:$0xff] %v405
      %422 = vst [vmem:[%s299 + $0x8] sm:$0xff] %v406
      %423 = vst [vmem:[%s299 + $0x10] sm:$0xff] %v407
      %424 = vst [vmem:[%s299 + $0x18] sm:$0xff] %v408
      %425 = vst [vmem:[%s299 + $0x20] sm:$0xff] %v409
      %426 = vst [vmem:[%s299 + $0x28] sm:$0xff] %v410
      %427 = vst [vmem:[%s299 + $0x30] sm:$0xff] %v411
      %428 = vst [vmem:[%s299 + $0x38] sm:$0xff] %v412
      %429 = vst [vmem:[%s299 + $0x40] sm:$0xff] %v413
      %430 = vst [vmem:[%s299 + $0x48] sm:$0xff] %v414
      %431 = vst [vmem:[%s299 + $0x50] sm:$0xff] %v415
      %432 = vst [vmem:[%s299 + $0x58] sm:$0xff] %v416
      %433 = vst [vmem:[%s299 + $0x60] sm:$0xff] %v417
      %434 = vst [vmem:[%s299 + $0x68] sm:$0xff] %v418
      %435 = vst [vmem:[%s299 + $0x70] sm:$0xff] %v419
      %436 = vst [vmem:[%s299 + $0x78] sm:$0xff] %v420
      %s437 = smul.u32 16, %s20
      %p438 = scmp.lt.s32.totalorder %s19, 1
      %s439 = scalar_select %p438, %s19, 1
      %p440 = scmp.lt.s32.totalorder %s437, 15
      %s441 = scalar_select %p440, %s437, 15
      %s442 = smul.addr %s439, 16
      %s443 = sadd.s32 %s441, %s442
      %s444 = smul.addr %s443, 8
      %s445 = scalar_lea.vmem %s4, %s444
      // Predicated region
      $region37: #{_lambda_.11} parent=35 // pred_check
        %p446 = pneg %p155
      $region38: #{_lambda_.11} parent=35 // pred_check_branch
        %448 = sbr.rel (%p446) target = $region40
      $region39: #{_lambda_.11} parent=35 // pred_region
        %s449 = smul.u32 16, %s20
      $region40: #{_lambda_.11} parent=35 // pred_fallthru
        _
    $region36: #{_lambda_.11} parent=5 // pred_fallthru
      _
    %p450 = scmp.le.s32.totalorder 2, %s10
    // Predicated region
    $region41: #{_lambda_.11} parent=5 // pred_check
      %p451 = pneg %p450
    $region42: #{_lambda_.11} parent=5 // pred_check_branch
      %453 = sbr.rel (%p451) target = $region44
    $region43: #{_lambda_.11} parent=5 // pred_region
      %s454 = ssub.s32 %s10, 2
      // Predicated region
      $region45: #{_lambda_.11} parent=43 // pred_check
        %p455 = pneg %p161
      $region46: #{_lambda_.11} parent=43 // pred_check_branch
        %457 = sbr.rel (%p455) target = $region48
      $region47: #{_lambda_.11} parent=43 // pred_region
        %s458 = smul.u32 16, %s22
        %p459 = scmp.lt.s32.totalorder %s21, 1
        %s460 = scalar_select %p459, %s21, 1
        %p461 = scmp.lt.s32.totalorder %s458, 15
        %s462 = scalar_select %p461, %s458, 15
        %s463 = smul.addr %s460, 16
        %s464 = sadd.s32 %s462, %s463
        %s465 = smul.addr %s464, 8
        %s466 = scalar_lea.vmem %s4, %s465
      $region48: #{_lambda_.11} parent=43 // pred_fallthru
        _
    $region44: #{_lambda_.11} parent=5 // pred_fallthru
      _
  $region6: #{_lambda_.11} parent=0 // loop_footer
    %s14 = sadd.s32 1, %s10
  $region7: #{_lambda_.11} parent=0 // loop_footer_branch
    %9 = sbr.rel target = $region3
  $region8: #{_lambda_.11} parent=0 // loop_exit
    _

</llo_original>
